<compile_context>
chip_gen: v6e
topology: v6e:2x2x1
jax: 0.10.0
libtpu: 0.0.40
codegen_flags: <defaults>
</compile_context>

<pallas_src>
import jax
import jax.numpy as jnp
from jax import lax
from jax.experimental import pallas as pl
from jax.experimental.pallas import tpu as pltpu

EPS = 1e-5
LANE = 128


def _round_up(a, m):
    return (a + m - 1) // m * m


# ----------------------------- Pallas kernel ------------------------------- #

def rese2_fused_kernel(x_ref, wbb_ref, bbb_ref, w1_ref, b1_ref,
                       wd1_ref, bd1_ref, wd2_ref, bd2_ref, o_ref):
    """x_ref: (bt, L, c_in)  ->  o_ref: (bt, L//3, c_out)."""
    bt, seq_len, _ = x_ref.shape
    _, lout, c_out = o_ref.shape
    cp = w1_ref.shape[2]

    def conv3_same(v, w_ref, b):
        # torch Conv1d (cross-correlation), K=3, padding='same'; BN pre-folded.
        # Three accumulated matmuls (no (M, 3C) taps tensor); batch folded
        # into M for MXU utilization.  Per-sample boundary rows are zero.
        b_, l_, c_ = v.shape
        zero = jnp.zeros_like(v[:, :1, :])
        prev = jnp.concatenate([zero, v[:, :-1, :]], axis=1)      # v[l-1]
        nxt = jnp.concatenate([v[:, 1:, :], zero], axis=1)        # v[l+1]
        out = (jnp.dot(prev.reshape(b_ * l_, c_), w_ref[0],
                       preferred_element_type=jnp.float32)
               + jnp.dot(v.reshape(b_ * l_, c_), w_ref[1],
                         preferred_element_type=jnp.float32)
               + jnp.dot(nxt.reshape(b_ * l_, c_), w_ref[2],
                         preferred_element_type=jnp.float32)
               + b)
        return out.reshape(b_, l_, w_ref.shape[2])

    x = x_ref[...]                                                 # (bt, L, c_in)

    # BasicBlock: conv + BN(folded) -> ReLU.  Dropout1d: identity (eval).
    h = jnp.maximum(conv3_same(x, wbb_ref, bbb_ref[...]), 0.0)     # (bt, L, cp)

    # conv1 + bn1 (folded)
    y = conv3_same(h, w1_ref, b1_ref[...])                         # (bt, L, cp)

    # Squeeze-and-Excitation: global average over L, two dense layers, sigmoid.
    s = jnp.mean(y, axis=1)                                        # (bt, cp)
    s = jnp.maximum(
        jnp.dot(s, wd1_ref[...], preferred_element_type=jnp.float32)
        + bd1_ref[...], 0.0)
    s = jnp.dot(s, wd2_ref[...], preferred_element_type=jnp.float32) + bd2_ref[...]
    s = 1.0 / (1.0 + jnp.exp(-s))                                  # sigmoid (EUP)

    # residual add + ReLU:  relu(y + y*s) == relu(y * (1 + s))
    z = jnp.maximum(y * (1.0 + s[:, None, :]), 0.0)                # (bt, L, cp)

    # MaxPool1d(kernel=3, stride=3): split L into (lout, 3) (lane axis
    # untouched), then elementwise max of the three window taps.
    zz = z[:, : 3 * lout, :].reshape(bt * lout, 3, cp)
    m = jnp.maximum(jnp.maximum(zz[:, 0, :], zz[:, 1, :]), zz[:, 2, :])
    m = m.reshape(bt, lout, cp)
    o_ref[...] = m[:, :, :c_out].astype(o_ref.dtype)               # drop pad lanes


# ------------------------------- Wrapper ----------------------------------- #

def _pick_batch_tile(n, seq_len, c_in, c_out, cp, lout, target_bytes=6 << 20):
    """Largest divisor of n whose per-step VMEM footprint stays ~target and
    that keeps >= min(n, 4) grid steps (pipelining depth + v7x megacore)."""
    per_sample = (seq_len * cp * 4) * 8 + 2 * (seq_len * c_in + lout * c_out) * 4
    cap = max(1, target_bytes // max(per_sample, 1))
    cap = min(cap, max(1, n // min(n, 4)))
    bt = 1
    for d in range(1, n + 1):
        if n % d == 0 and d <= cap:
            bt = d
    return bt


def _vmem_limit_bytes(bt, seq_len, c_in, c_out, cp, lout):
    """Derive the scoped-VMEM request from the tile (double-buffered blocks +
    weights + in-kernel activations), clamped to be safe on v7x (64 MiB/TC)."""
    x_b = bt * seq_len * c_in * 4
    o_b = bt * lout * c_out * 4
    w_b = (3 * c_in * cp + 3 * cp * cp + 2 * cp * cp + 4 * cp) * 4
    act_b = bt * seq_len * cp * 4 * 8
    est = 2 * (x_b + o_b) + 2 * w_b + act_b
    return int(min(max(2 * est, 32 << 20), 48 << 20))


def rese2_forward(x_ncl, kp, *, batch_tile=None):
    """x_ncl: (N, Cin, L) float32 (PyTorch layout). Returns (N, Cout, L//3)."""
    n, c_in, seq_len = x_ncl.shape
    assert c_in == kp["c_in"]
    c_out, cp = kp["c_out"], kp["cp"]
    lout = seq_len // 3

    # NCL -> NLC (channels on lanes).  No channel padding in HBM: the kernel
    # streams only the real (L, c_in) bytes per sample.
    x_nlc = jnp.transpose(x_ncl, (0, 2, 1)).astype(jnp.float32)

    if batch_tile is None:
        batch_tile = _pick_batch_tile(n, seq_len, c_in, c_out, cp, lout)
    assert n % batch_tile == 0
    grid = (n // batch_tile,)

    pooled = pl.pallas_call(
        rese2_fused_kernel,
        out_shape=jax.ShapeDtypeStruct((n, lout, c_out), jnp.float32),
        grid=grid,
        in_specs=[
            pl.BlockSpec((batch_tile, seq_len, c_in), lambda i: (i, 0, 0)),  # x
            pl.BlockSpec((3, c_in, cp), lambda i: (0, 0, 0)),  # conv_bb W (BN folded)
            pl.BlockSpec((1, cp), lambda i: (0, 0)),           # conv_bb bias
            pl.BlockSpec((3, cp, cp), lambda i: (0, 0, 0)),    # conv1 W (BN folded)
            pl.BlockSpec((1, cp), lambda i: (0, 0)),           # conv1 bias
            pl.BlockSpec((cp, cp), lambda i: (0, 0)),          # SE dense1 W (in,out)
            pl.BlockSpec((1, cp), lambda i: (0, 0)),           # SE dense1 b
            pl.BlockSpec((cp, cp), lambda i: (0, 0)),          # SE dense2 W (in,out)
            pl.BlockSpec((1, cp), lambda i: (0, 0)),           # SE dense2 b
        ],
        out_specs=pl.BlockSpec((batch_tile, lout, c_out), lambda i: (i, 0, 0)),
        compiler_params=pltpu.CompilerParams(
            dimension_semantics=("parallel",),
            vmem_limit_bytes=_vmem_limit_bytes(
                batch_tile, seq_len, c_in, c_out, cp, lout)),
    )(x_nlc, kp["w_bb"], kp["b_bb"], kp["w1"], kp["b1"],
      kp["wd1"], kp["bd1"], kp["wd2"], kp["bd2"])

    # Back to PyTorch NCL layout.
    return jnp.transpose(pooled, (0, 2, 1))


# ------------------------- Parameters & reference --------------------------- #

def init_params(key, c_in, c_out):
    """Deterministic synthetic parameters in PyTorch layout."""
    ks = jax.random.split(key, 20)
    nrm = lambda i, shape, s=0.3: s * jax.random.normal(ks[i], shape, jnp.float32)
    return {
        "conv_bb_w": nrm(0, (c_out, c_in, 3)), "conv_bb_b": nrm(1, (c_out,), 0.1),
        "bn_bb_g": 1.0 + nrm(2, (c_out,), 0.1), "bn_bb_b": nrm(3, (c_out,), 0.1),
        "bn_bb_m": nrm(4, (c_out,), 0.05),
        "bn_bb_v": jax.random.uniform(ks[5], (c_out,), jnp.float32, 0.5, 1.5),
        "conv1_w": nrm(6, (c_out, c_out, 3)), "conv1_b": nrm(7, (c_out,), 0.1),
        "bn1_g": 1.0 + nrm(8, (c_out,), 0.1), "bn1_b": nrm(9, (c_out,), 0.1),
        "bn1_m": nrm(10, (c_out,), 0.05),
        "bn1_v": jax.random.uniform(ks[11], (c_out,), jnp.float32, 0.5, 1.5),
        "d1_w": nrm(12, (c_out, c_out)), "d1_b": nrm(13, (c_out,), 0.1),
        "d2_w": nrm(14, (c_out, c_out)), "d2_b": nrm(15, (c_out,), 0.1),
    }


def kernel_params(p):
    """PyTorch-layout params -> kernel-ready: fold eval-BN into conv weights,
    keep conv weights in (3, Cin, Cout) tap-split form, zero-pad only weight
    output channels (and conv1/dense input channels) to a lane multiple
    (exact), and transpose dense weights to (in, out)."""
    c_out, c_in, _ = p["conv_bb_w"].shape
    cp = _round_up(c_out, LANE)

    def fold(conv_w, conv_b, g, beta, mean, var):
        s = g / jnp.sqrt(var + EPS)                               # (Cout,)
        w = jnp.transpose(conv_w, (2, 1, 0)) * s[None, None, :]   # (3, Cin, Cout)
        b = conv_b * s + (beta - mean * s)
        return w.astype(jnp.float32), b.astype(jnp.float32)

    w_bb, b_bb = fold(p["conv_bb_w"], p["conv_bb_b"],
                      p["bn_bb_g"], p["bn_bb_b"], p["bn_bb_m"], p["bn_bb_v"])
    w1, b1 = fold(p["conv1_w"], p["conv1_b"],
                  p["bn1_g"], p["bn1_b"], p["bn1_m"], p["bn1_v"])

    w_bb_p = jnp.pad(w_bb, ((0, 0), (0, 0), (0, cp - c_out)))        # (3, c_in, cp)
    w1_p = jnp.pad(w1, ((0, 0), (0, cp - c_out), (0, cp - c_out)))   # (3, cp, cp)

    def pad_row(v):                                                  # (C,) -> (1, cp)
        return jnp.pad(v.astype(jnp.float32), (0, cp - v.shape[0])).reshape(1, cp)

    def pad_mat(w):                                                  # (in,out)->(cp,cp)
        return jnp.pad(w.astype(jnp.float32),
                       ((0, cp - w.shape[0]), (0, cp - w.shape[1])))

    return {
        "c_in": c_in, "c_out": c_out, "cp": cp,
        "w_bb": w_bb_p, "b_bb": pad_row(b_bb),
        "w1": w1_p, "b1": pad_row(b1),
        "wd1": pad_mat(p["d1_w"].T), "bd1": pad_row(p["d1_b"]),
        "wd2": pad_mat(p["d2_w"].T), "bd2": pad_row(p["d2_b"]),
    }


def ref_forward(x, p):
    """Plain-JAX reference in PyTorch NCL layout (eval-mode BN / dropout)."""
    def bn(v, g, b, m, var):
        return ((v - m[None, :, None]) / jnp.sqrt(var[None, :, None] + EPS)
                * g[None, :, None] + b[None, :, None])

    def conv(v, w, b):
        y = lax.conv_general_dilated(v, w, window_strides=(1,), padding="SAME",
                                     dimension_numbers=("NCH", "OIH", "NCH"),
                                     precision=lax.Precision.HIGHEST)
        return y + b[None, :, None]

    h = jnp.maximum(bn(conv(x, p["conv_bb_w"], p["conv_bb_b"]),
                       p["bn_bb_g"], p["bn_bb_b"], p["bn_bb_m"], p["bn_bb_v"]), 0.0)
    y = bn(conv(h, p["conv1_w"], p["conv1_b"]),
           p["bn1_g"], p["bn1_b"], p["bn1_m"], p["bn1_v"])
    pooled = jnp.mean(y, axis=-1)                                   # (N, Cout)
    s = jnp.maximum(pooled @ p["d1_w"].T + p["d1_b"], 0.0)
    s = jax.nn.sigmoid(s @ p["d2_w"].T + p["d2_b"])
    z = jnp.maximum(y + y * s[:, :, None], 0.0)
    n, c, seq_len = z.shape
    lout = seq_len // 3
    return jnp.max(z[:, :, : lout * 3].reshape(n, c, lout, 3), axis=-1)


# --------------------------------- Main ------------------------------------ #

if __name__ == "__main__":
    N, C_IN, C_OUT, L = 2, 4, 8, 24          # kernel_size_avg == L (global SE pool)

    key = jax.random.PRNGKey(0)
    k_x, k_p = jax.random.split(key)
    x = jax.random.normal(k_x, (N, C_IN, L), jnp.float32)   # PyTorch NCL input

    params = init_params(k_p, C_IN, C_OUT)
    kp = kernel_params(params)

    out = jax.block_until_ready(rese2_forward(x, kp))
    ref = jax.block_until_ready(ref_forward(x, params))

    assert out.shape == (N, C_OUT, L // 3), out.shape
    max_err = float(jnp.max(jnp.abs(out - ref)))
    # default-precision MXU matmuls (bf16 passes) vs HIGHEST-precision reference
    if max_err > 3e-2:
        raise RuntimeError(f"mismatch vs reference: max_err={max_err}")

    print("KERNEL_OK")
</pallas_src>

<mosaic_0001>
module attributes {stable_mosaic.version = 11 : i64} {
  func.func @rese2_fused_kernel(%arg0: i32, %arg1: memref<1x24x4xf32, #tpu.memory_space<vmem>>, %arg2: memref<3x4x128xf32, #tpu.memory_space<vmem>>, %arg3: memref<1x128xf32, #tpu.memory_space<vmem>>, %arg4: memref<3x128x128xf32, #tpu.memory_space<vmem>>, %arg5: memref<1x128xf32, #tpu.memory_space<vmem>>, %arg6: memref<128x128xf32, #tpu.memory_space<vmem>>, %arg7: memref<1x128xf32, #tpu.memory_space<vmem>>, %arg8: memref<128x128xf32, #tpu.memory_space<vmem>>, %arg9: memref<1x128xf32, #tpu.memory_space<vmem>>, %arg10: memref<1x8x8xf32, #tpu.memory_space<vmem>>) attributes {dimension_semantics = [#tpu.dimension_semantics<parallel>], iteration_bounds = array<i64: 2>, scalar_prefetch = 0 : i64, scratch_operands = 0 : i64, tpu.core_type = #tpu.core_type<tc>, window_params = [{transform_indices = @transform_0, window_bounds = array<i64: 1, 24, 4>}, {pipeline_mode = #tpu.pipeline_mode<synchronous>, transform_indices = @transform_1, window_bounds = array<i64: 3, 4, 128>}, {pipeline_mode = #tpu.pipeline_mode<synchronous>, transform_indices = @transform_2, window_bounds = array<i64: 1, 128>}, {pipeline_mode = #tpu.pipeline_mode<synchronous>, transform_indices = @transform_3, window_bounds = array<i64: 3, 128, 128>}, {pipeline_mode = #tpu.pipeline_mode<synchronous>, transform_indices = @transform_4, window_bounds = array<i64: 1, 128>}, {pipeline_mode = #tpu.pipeline_mode<synchronous>, transform_indices = @transform_5, window_bounds = array<i64: 128, 128>}, {pipeline_mode = #tpu.pipeline_mode<synchronous>, transform_indices = @transform_6, window_bounds = array<i64: 1, 128>}, {pipeline_mode = #tpu.pipeline_mode<synchronous>, transform_indices = @transform_7, window_bounds = array<i64: 128, 128>}, {pipeline_mode = #tpu.pipeline_mode<synchronous>, transform_indices = @transform_8, window_bounds = array<i64: 1, 128>}, {transform_indices = @transform_9, window_bounds = array<i64: 1, 8, 8>}]} {
    %c0 = arith.constant 0 : index
    %c0_0 = arith.constant 0 : index
    %c0_1 = arith.constant 0 : index
    %0 = vector.load %arg1[%c0, %c0_0, %c0_1] : memref<1x24x4xf32, #tpu.memory_space<vmem>>, vector<1x24x4xf32>
    %c0_2 = arith.constant 0 : index
    %c0_3 = arith.constant 0 : index
    %1 = vector.load %arg3[%c0_2, %c0_3] : memref<1x128xf32, #tpu.memory_space<vmem>>, vector<1x128xf32>
    %cst = arith.constant 0.000000e+00 : f32
    %2 = vector.broadcast %cst : f32 to vector<1x1x4xf32>
    %3 = vector.extract_strided_slice %0 {offsets = [0, 0, 0], sizes = [1, 23, 4], strides = [1, 1, 1]} : vector<1x24x4xf32> to vector<1x23x4xf32>
    %4 = tpu.concatenate %2, %3 in 1 : vector<1x1x4xf32>, vector<1x23x4xf32> -> vector<1x24x4xf32>
    %5 = vector.extract_strided_slice %0 {offsets = [0, 1, 0], sizes = [1, 23, 4], strides = [1, 1, 1]} : vector<1x24x4xf32> to vector<1x23x4xf32>
    %6 = tpu.concatenate %5, %2 in 1 : vector<1x23x4xf32>, vector<1x1x4xf32> -> vector<1x24x4xf32>
    %7 = vector.shape_cast %4 : vector<1x24x4xf32> to vector<24x4xf32>
    %c0_4 = arith.constant 0 : index
    %c0_5 = arith.constant 0 : index
    %c0_6 = arith.constant 0 : index
    %8 = vector.load %arg2[%c0_4, %c0_5, %c0_6] : memref<3x4x128xf32, #tpu.memory_space<vmem>>, vector<1x4x128xf32>
    %9 = vector.shape_cast %8 : vector<1x4x128xf32> to vector<4x128xf32>
    %cst_7 = arith.constant dense<0.000000e+00> : vector<24x128xf32>
    %10 = tpu.matmul %7, %9, %cst_7 {dimension_numbers = #tpu.dot_dimension_numbers<[1], [0], [0], [1], [0, 0, 1, 1], [], []>} : vector<24x4xf32>, vector<4x128xf32>, vector<24x128xf32> -> vector<24x128xf32>
    %11 = vector.shape_cast %0 : vector<1x24x4xf32> to vector<24x4xf32>
    %c1 = arith.constant 1 : index
    %c0_8 = arith.constant 0 : index
    %c0_9 = arith.constant 0 : index
    %12 = vector.load %arg2[%c1, %c0_8, %c0_9] : memref<3x4x128xf32, #tpu.memory_space<vmem>>, vector<1x4x128xf32>
    %13 = vector.shape_cast %12 : vector<1x4x128xf32> to vector<4x128xf32>
    %cst_10 = arith.constant dense<0.000000e+00> : vector<24x128xf32>
    %14 = tpu.matmul %11, %13, %cst_10 {dimension_numbers = #tpu.dot_dimension_numbers<[1], [0], [0], [1], [0, 0, 1, 1], [], []>} : vector<24x4xf32>, vector<4x128xf32>, vector<24x128xf32> -> vector<24x128xf32>
    %15 = arith.addf %10, %14 : vector<24x128xf32>
    %16 = vector.shape_cast %6 : vector<1x24x4xf32> to vector<24x4xf32>
    %c2 = arith.constant 2 : index
    %c0_11 = arith.constant 0 : index
    %c0_12 = arith.constant 0 : index
    %17 = vector.load %arg2[%c2, %c0_11, %c0_12] : memref<3x4x128xf32, #tpu.memory_space<vmem>>, vector<1x4x128xf32>
    %18 = vector.shape_cast %17 : vector<1x4x128xf32> to vector<4x128xf32>
    %cst_13 = arith.constant dense<0.000000e+00> : vector<24x128xf32>
    %19 = tpu.matmul %16, %18, %cst_13 {dimension_numbers = #tpu.dot_dimension_numbers<[1], [0], [0], [1], [0, 0, 1, 1], [], []>} : vector<24x4xf32>, vector<4x128xf32>, vector<24x128xf32> -> vector<24x128xf32>
    %20 = arith.addf %15, %19 : vector<24x128xf32>
    %21 = vector.broadcast %1 : vector<1x128xf32> to vector<24x128xf32>
    %22 = arith.addf %20, %21 : vector<24x128xf32>
    %23 = vector.shape_cast %22 : vector<24x128xf32> to vector<1x24x128xf32>
    %cst_14 = arith.constant 0.000000e+00 : f32
    %24 = vector.broadcast %cst_14 : f32 to vector<1x24x128xf32>
    %25 = arith.maximumf %23, %24 : vector<1x24x128xf32>
    %c0_15 = arith.constant 0 : index
    %c0_16 = arith.constant 0 : index
    %26 = vector.load %arg5[%c0_15, %c0_16] : memref<1x128xf32, #tpu.memory_space<vmem>>, vector<1x128xf32>
    %cst_17 = arith.constant 0.000000e+00 : f32
    %27 = vector.broadcast %cst_17 : f32 to vector<1x1x128xf32>
    %28 = vector.extract_strided_slice %25 {offsets = [0, 0, 0], sizes = [1, 23, 128], strides = [1, 1, 1]} : vector<1x24x128xf32> to vector<1x23x128xf32>
    %29 = tpu.concatenate %27, %28 in 1 : vector<1x1x128xf32>, vector<1x23x128xf32> -> vector<1x24x128xf32>
    %30 = vector.extract_strided_slice %25 {offsets = [0, 1, 0], sizes = [1, 23, 128], strides = [1, 1, 1]} : vector<1x24x128xf32> to vector<1x23x128xf32>
    %31 = tpu.concatenate %30, %27 in 1 : vector<1x23x128xf32>, vector<1x1x128xf32> -> vector<1x24x128xf32>
    %32 = vector.shape_cast %29 : vector<1x24x128xf32> to vector<24x128xf32>
    %c0_18 = arith.constant 0 : index
    %c0_19 = arith.constant 0 : index
    %c0_20 = arith.constant 0 : index
    %33 = vector.load %arg4[%c0_18, %c0_19, %c0_20] : memref<3x128x128xf32, #tpu.memory_space<vmem>>, vector<1x128x128xf32>
    %34 = vector.shape_cast %33 : vector<1x128x128xf32> to vector<128x128xf32>
    %cst_21 = arith.constant dense<0.000000e+00> : vector<24x128xf32>
    %35 = tpu.matmul %32, %34, %cst_21 {dimension_numbers = #tpu.dot_dimension_numbers<[1], [0], [0], [1], [0, 0, 1, 1], [], []>} : vector<24x128xf32>, vector<128x128xf32>, vector<24x128xf32> -> vector<24x128xf32>
    %36 = vector.shape_cast %25 : vector<1x24x128xf32> to vector<24x128xf32>
    %c1_22 = arith.constant 1 : index
    %c0_23 = arith.constant 0 : index
    %c0_24 = arith.constant 0 : index
    %37 = vector.load %arg4[%c1_22, %c0_23, %c0_24] : memref<3x128x128xf32, #tpu.memory_space<vmem>>, vector<1x128x128xf32>
    %38 = vector.shape_cast %37 : vector<1x128x128xf32> to vector<128x128xf32>
    %cst_25 = arith.constant dense<0.000000e+00> : vector<24x128xf32>
    %39 = tpu.matmul %36, %38, %cst_25 {dimension_numbers = #tpu.dot_dimension_numbers<[1], [0], [0], [1], [0, 0, 1, 1], [], []>} : vector<24x128xf32>, vector<128x128xf32>, vector<24x128xf32> -> vector<24x128xf32>
    %40 = arith.addf %35, %39 : vector<24x128xf32>
    %41 = vector.shape_cast %31 : vector<1x24x128xf32> to vector<24x128xf32>
    %c2_26 = arith.constant 2 : index
    %c0_27 = arith.constant 0 : index
    %c0_28 = arith.constant 0 : index
    %42 = vector.load %arg4[%c2_26, %c0_27, %c0_28] : memref<3x128x128xf32, #tpu.memory_space<vmem>>, vector<1x128x128xf32>
    %43 = vector.shape_cast %42 : vector<1x128x128xf32> to vector<128x128xf32>
    %cst_29 = arith.constant dense<0.000000e+00> : vector<24x128xf32>
    %44 = tpu.matmul %41, %43, %cst_29 {dimension_numbers = #tpu.dot_dimension_numbers<[1], [0], [0], [1], [0, 0, 1, 1], [], []>} : vector<24x128xf32>, vector<128x128xf32>, vector<24x128xf32> -> vector<24x128xf32>
    %45 = arith.addf %40, %44 : vector<24x128xf32>
    %46 = vector.broadcast %26 : vector<1x128xf32> to vector<24x128xf32>
    %47 = arith.addf %45, %46 : vector<24x128xf32>
    %48 = vector.shape_cast %47 : vector<24x128xf32> to vector<1x24x128xf32>
    %cst_30 = arith.constant dense<0.000000e+00> : vector<1x128xf32>
    %49 = vector.multi_reduction <add>, %48, %cst_30 [1] : vector<1x24x128xf32> to vector<1x128xf32>
    %cst_31 = arith.constant 2.400000e+01 : f32
    %50 = vector.broadcast %cst_31 : f32 to vector<1x128xf32>
    %51 = arith.divf %49, %50 : vector<1x128xf32>
    %c0_32 = arith.constant 0 : index
    %c0_33 = arith.constant 0 : index
    %52 = vector.load %arg6[%c0_32, %c0_33] : memref<128x128xf32, #tpu.memory_space<vmem>>, vector<128x128xf32>
    %cst_34 = arith.constant dense<0.000000e+00> : vector<1x128xf32>
    %53 = tpu.matmul %51, %52, %cst_34 {dimension_numbers = #tpu.dot_dimension_numbers<[1], [0], [0], [1], [0, 0, 1, 1], [], []>} : vector<1x128xf32>, vector<128x128xf32>, vector<1x128xf32> -> vector<1x128xf32>
    %c0_35 = arith.constant 0 : index
    %c0_36 = arith.constant 0 : index
    %54 = vector.load %arg7[%c0_35, %c0_36] : memref<1x128xf32, #tpu.memory_space<vmem>>, vector<1x128xf32>
    %55 = arith.addf %53, %54 : vector<1x128xf32>
    %cst_37 = arith.constant 0.000000e+00 : f32
    %56 = vector.broadcast %cst_37 : f32 to vector<1x128xf32>
    %57 = arith.maximumf %55, %56 : vector<1x128xf32>
    %c0_38 = arith.constant 0 : index
    %c0_39 = arith.constant 0 : index
    %58 = vector.load %arg8[%c0_38, %c0_39] : memref<128x128xf32, #tpu.memory_space<vmem>>, vector<128x128xf32>
    %cst_40 = arith.constant dense<0.000000e+00> : vector<1x128xf32>
    %59 = tpu.matmul %57, %58, %cst_40 {dimension_numbers = #tpu.dot_dimension_numbers<[1], [0], [0], [1], [0, 0, 1, 1], [], []>} : vector<1x128xf32>, vector<128x128xf32>, vector<1x128xf32> -> vector<1x128xf32>
    %c0_41 = arith.constant 0 : index
    %c0_42 = arith.constant 0 : index
    %60 = vector.load %arg9[%c0_41, %c0_42] : memref<1x128xf32, #tpu.memory_space<vmem>>, vector<1x128xf32>
    %61 = arith.addf %59, %60 : vector<1x128xf32>
    %cst_43 = arith.constant 0.000000e+00 : f32
    %62 = vector.broadcast %cst_43 : f32 to vector<1x128xf32>
    %63 = arith.subf %62, %61 : vector<1x128xf32>
    %64 = math.exp %63 : vector<1x128xf32>
    %cst_44 = arith.constant 1.000000e+00 : f32
    %65 = vector.broadcast %cst_44 : f32 to vector<1x128xf32>
    %66 = arith.addf %65, %64 : vector<1x128xf32>
    %cst_45 = arith.constant 1.000000e+00 : f32
    %67 = vector.broadcast %cst_45 : f32 to vector<1x128xf32>
    %68 = arith.divf %67, %66 : vector<1x128xf32>
    %69 = vector.shape_cast %68 : vector<1x128xf32> to vector<1x1x128xf32>
    %cst_46 = arith.constant 1.000000e+00 : f32
    %70 = vector.broadcast %cst_46 : f32 to vector<1x1x128xf32>
    %71 = arith.addf %70, %69 : vector<1x1x128xf32>
    %72 = vector.broadcast %71 : vector<1x1x128xf32> to vector<1x24x128xf32>
    %73 = arith.mulf %48, %72 : vector<1x24x128xf32>
    %cst_47 = arith.constant 0.000000e+00 : f32
    %74 = vector.broadcast %cst_47 : f32 to vector<1x24x128xf32>
    %75 = arith.maximumf %73, %74 : vector<1x24x128xf32>
    %76 = vector.shape_cast %75 : vector<1x24x128xf32> to vector<8x3x128xf32>
    %77 = vector.extract_strided_slice %76 {offsets = [0, 0, 0], sizes = [8, 1, 128], strides = [1, 1, 1]} : vector<8x3x128xf32> to vector<8x1x128xf32>
    %78 = vector.shape_cast %77 : vector<8x1x128xf32> to vector<8x128xf32>
    %79 = vector.extract_strided_slice %76 {offsets = [0, 1, 0], sizes = [8, 1, 128], strides = [1, 1, 1]} : vector<8x3x128xf32> to vector<8x1x128xf32>
    %80 = vector.shape_cast %79 : vector<8x1x128xf32> to vector<8x128xf32>
    %81 = arith.maximumf %78, %80 : vector<8x128xf32>
    %82 = vector.extract_strided_slice %76 {offsets = [0, 2, 0], sizes = [8, 1, 128], strides = [1, 1, 1]} : vector<8x3x128xf32> to vector<8x1x128xf32>
    %83 = vector.shape_cast %82 : vector<8x1x128xf32> to vector<8x128xf32>
    %84 = arith.maximumf %81, %83 : vector<8x128xf32>
    %85 = vector.shape_cast %84 : vector<8x128xf32> to vector<1x8x128xf32>
    %86 = vector.extract_strided_slice %85 {offsets = [0, 0, 0], sizes = [1, 8, 8], strides = [1, 1, 1]} : vector<1x8x128xf32> to vector<1x8x8xf32>
    %c0_48 = arith.constant 0 : index
    %c0_49 = arith.constant 0 : index
    %c0_50 = arith.constant 0 : index
    %87 = vector.load %arg10[%c0_48, %c0_49, %c0_50] : memref<1x8x8xf32, #tpu.memory_space<vmem>>, vector<1x8x8xf32>
    tpu.vector_store %arg10[%c0_48, %c0_49, %c0_50], %86 {strides = array<i32>} : memref<1x8x8xf32, #tpu.memory_space<vmem>>, vector<1x8x8xf32>,
    return
  }
  func.func @transform_0(%arg0: i32) -> (i32, i32, i32) {
    %c0_i32 = arith.constant 0 : i32
    %c0_i32_0 = arith.constant 0 : i32
    %c0_i32_1 = arith.constant 0 : i32
    return %arg0, %c0_i32, %c0_i32_0 : i32, i32, i32
  }
  func.func @transform_1(%arg0: i32) -> (i32, i32, i32) {
    %c0_i32 = arith.constant 0 : i32
    %c0_i32_0 = arith.constant 0 : i32
    %c0_i32_1 = arith.constant 0 : i32
    %c0_i32_2 = arith.constant 0 : i32
    return %c0_i32, %c0_i32_0, %c0_i32_1 : i32, i32, i32
  }
  func.func @transform_2(%arg0: i32) -> (i32, i32) {
    %c0_i32 = arith.constant 0 : i32
    %c0_i32_0 = arith.constant 0 : i32
    %c0_i32_1 = arith.constant 0 : i32
    return %c0_i32, %c0_i32_0 : i32, i32
  }
  func.func @transform_3(%arg0: i32) -> (i32, i32, i32) {
    %c0_i32 = arith.constant 0 : i32
    %c0_i32_0 = arith.constant 0 : i32
    %c0_i32_1 = arith.constant 0 : i32
    %c0_i32_2 = arith.constant 0 : i32
    return %c0_i32, %c0_i32_0, %c0_i32_1 : i32, i32, i32
  }
  func.func @transform_4(%arg0: i32) -> (i32, i32) {
    %c0_i32 = arith.constant 0 : i32
    %c0_i32_0 = arith.constant 0 : i32
    %c0_i32_1 = arith.constant 0 : i32
    return %c0_i32, %c0_i32_0 : i32, i32
  }
  func.func @transform_5(%arg0: i32) -> (i32, i32) {
    %c0_i32 = arith.constant 0 : i32
    %c0_i32_0 = arith.constant 0 : i32
    %c0_i32_1 = arith.constant 0 : i32
    return %c0_i32, %c0_i32_0 : i32, i32
  }
  func.func @transform_6(%arg0: i32) -> (i32, i32) {
    %c0_i32 = arith.constant 0 : i32
    %c0_i32_0 = arith.constant 0 : i32
    %c0_i32_1 = arith.constant 0 : i32
    return %c0_i32, %c0_i32_0 : i32, i32
  }
  func.func @transform_7(%arg0: i32) -> (i32, i32) {
    %c0_i32 = arith.constant 0 : i32
    %c0_i32_0 = arith.constant 0 : i32
    %c0_i32_1 = arith.constant 0 : i32
    return %c0_i32, %c0_i32_0 : i32, i32
  }
  func.func @transform_8(%arg0: i32) -> (i32, i32) {
    %c0_i32 = arith.constant 0 : i32
    %c0_i32_0 = arith.constant 0 : i32
    %c0_i32_1 = arith.constant 0 : i32
    return %c0_i32, %c0_i32_0 : i32, i32
  }
  func.func @transform_9(%arg0: i32) -> (i32, i32, i32) {
    %c0_i32 = arith.constant 0 : i32
    %c0_i32_0 = arith.constant 0 : i32
    %c0_i32_1 = arith.constant 0 : i32
    return %arg0, %c0_i32, %c0_i32_0 : i32, i32, i32
  }
}

</mosaic_0001>

<llo_original>
// kernel: tpu_custom_call.1
$region0: #{tpu_custom_call.1}
  #allocation0 [shape = 'u32[]', space=smem, size = 0x4, offset = 0x4, fixed_abs, tag = 'smem constant byte address 0x4 - core index']
  #allocation1 [shape = 'u32[144,128]{1,0:T(1,128)}', space=vmem, size = 0x12000, scoped, tag = 'internal scratch']
  %s0 = inlined_call_operand.vmem [shape: f32[2,24,4], index: 0, kind: input, shape index: {}]
  %s1 = inlined_call_operand.vmem [shape: f32[3,4,128], index: 1, kind: input, shape index: {}]
  %s2 = inlined_call_operand.vmem [shape: f32[1,128], index: 2, kind: input, shape index: {}]
  %s3 = inlined_call_operand.hbm [shape: f32[3,128,128], index: 3, kind: input, shape index: {}]
  %s4 = inlined_call_operand.vmem [shape: f32[1,128], index: 4, kind: input, shape index: {}]
  %s5 = inlined_call_operand.hbm [shape: f32[128,128], index: 5, kind: input, shape index: {}]
  %s6 = inlined_call_operand.vmem [shape: f32[1,128], index: 6, kind: input, shape index: {}]
  %s7 = inlined_call_operand.hbm [shape: f32[128,128], index: 7, kind: input, shape index: {}]
  %s8 = inlined_call_operand.vmem [shape: f32[1,128], index: 8, kind: input, shape index: {}]
  %s9 = inlined_call_operand.hbm [shape: f32[2,8,8], index: 9, kind: output, shape index: {}]
  %s10 = sld [smem:[#allocation0]]
  $region81: #{tpu_custom_call.1} parent=0
    _
  %s12 = ssub.s32 1, %s10
  %s13 = scalar_select 0, %s12, %s10
  $region1: #{tpu_custom_call.1} parent=0
    #allocation2 [shape = 'u8[196608]{0}', space=vmem, size = 0x30000, scoped, tag = 'input window, operand 3, single buffered']
    #allocation3 [shape = 's32[2]{0}', space=sflag, size = 0x8, scoped, tag = 'scoped memory for tpu_custom_call.1']
    #allocation4 [shape = 's32[2]{0}', space=sflag, size = 0x8, scoped, tag = 'scoped memory for tpu_custom_call.1']
    #allocation5 [shape = 'u8[65536]{0}', space=vmem, size = 0x10000, scoped, tag = 'input window, operand 5, single buffered']
    #allocation6 [shape = 's32[1]{0}', space=sflag, size = 0x4, scoped, tag = 'scoped memory for tpu_custom_call.1']
    #allocation7 [shape = 'u8[65536]{0}', space=vmem, size = 0x10000, scoped, tag = 'input window, operand 7, single buffered']
    #allocation8 [shape = 'u8[8192]{0}', space=vmem, size = 0x2000, scoped, tag = 'output window, operand 0']
    %14 = vsyncpa [#allocation3], 0
    %15 = vsyncpa [#allocation6], 0
    %16 = vsyncpa [#allocation4], 0
    %s17 = scalar_lea.sflag [#allocation4], 1
    %18 = vsyncpa %s17, 0
    loop: start=0, step=1, limit=4
    $region2: #{tpu_custom_call.1} parent=1 // loop_pre_header
      _
    $region3: #{tpu_custom_call.1} parent=1 // loop_header
      %s20 = sphi 0, %s24
      %p21 = scmp.ge.s32.totalorder %s20, 4
      %s30 = sphi 0, %s32
      %s33 = sphi 0, %s30
      %s34 = sphi 0, %s33
      %s50 = sphi 0, %s34
      %s54 = sphi 0, %s54
      %s56 = sphi 0, %s54
      %s57 = sphi 0, %s56
      %s71 = sphi 0, %s57
      %s75 = sphi 0, %s75
      %s77 = sphi 0, %s75
      %s78 = sphi 0, %s77
      %s92 = sphi 0, %s78
      %s96 = sphi 0, %s96
      %s98 = sphi 0, %s96
      %s99 = sphi 0, %s98
      %s113 = sphi 0, %s99
      %s117 = sphi 0, %s117
      %s119 = sphi 0, %s117
      %s120 = sphi 0, %s119
      %s134 = sphi 0, %s120
      %s138 = sphi 0, %s138
      %s140 = sphi 0, %s138
      %s141 = sphi 0, %s140
      %s155 = sphi 0, %s141
      %s159 = sphi 0, %s159
      %s161 = sphi 0, %s159
      %s162 = sphi 0, %s161
      %s176 = sphi 0, %s162
      %s180 = sphi 0, %s180
      %s182 = sphi 0, %s180
      %s183 = sphi 0, %s182
      %s197 = sphi 0, %s183
      %s201 = sphi 0, %s201
      %s203 = sphi 0, %s201
      %s204 = sphi 0, %s203
      %s218 = sphi 0, %s204
      %s224 = sphi 0, %s226
      %s227 = sphi 0, %s224
      %s228 = sphi 0, %s227
      %s244 = sphi 0, %s228
    $region4: #{tpu_custom_call.1} parent=1 // loop_header_branch
      %23 = sbr.rel (%p21) target = $region8
    $region5: #{tpu_custom_call.1} parent=1 // loop_body
      %s25 = ssub.s32 %s20, 1
      %s26 = ssub.s32 %s20, 2
      %s27 = sadd.s32 %s20, 1
      %s28 = ssub.s32 %s20, %s27
      %p29 = scmp.eq.s32.totalorder %s28, 0
      %s31 = sadd.s32 %s30, 1
      %s32 = scalar_select %p29, %s30, %s31
      %p35 = pneg %p29
      %p36 = scmp.eq.s32.totalorder %s20, 1
      %p37 = por %p35, %p36
      %p38 = scmp.ne.s32.totalorder %s30, %s33
      %p39 = scmp.eq.s32.totalorder %s20, 0
      %p40 = por %p38, %p39
      %p41 = scmp.ne.s32.totalorder %s30, %s33
      %p42 = scmp.eq.s32.totalorder %s25, 1
      %p43 = por %p41, %p42
      %p44 = scmp.ne.s32.totalorder %s33, %s34
      %p45 = scmp.eq.s32.totalorder %s25, 0
      %p46 = por %p44, %p45
      %p47 = scmp.ne.s32.totalorder %s33, %s34
      %p48 = scmp.eq.s32.totalorder %s26, 1
      %p49 = por %p47, %p48
      %p51 = scmp.ne.s32.totalorder %s34, %s50
      %p52 = scmp.eq.s32.totalorder %s26, 0
      %p53 = por %p51, %p52
      %s55 = sadd.s32 %s54, 1
      %p58 = scmp.eq.s32.totalorder %s20, 1
      %p59 = scmp.ne.s32.totalorder %s54, %s56
      %p60 = scmp.eq.s32.totalorder %s20, 0
      %p61 = por %p59, %p60
      %p62 = scmp.ne.s32.totalorder %s54, %s56
      %p63 = scmp.eq.s32.totalorder %s25, 1
      %p64 = por %p62, %p63
      %p65 = scmp.ne.s32.totalorder %s56, %s57
      %p66 = scmp.eq.s32.totalorder %s25, 0
      %p67 = por %p65, %p66
      %p68 = scmp.ne.s32.totalorder %s56, %s57
      %p69 = scmp.eq.s32.totalorder %s26, 1
      %p70 = por %p68, %p69
      %p72 = scmp.ne.s32.totalorder %s57, %s71
      %p73 = scmp.eq.s32.totalorder %s26, 0
      %p74 = por %p72, %p73
      %s76 = sadd.s32 %s75, 1
      %p79 = scmp.eq.s32.totalorder %s20, 1
      %p80 = scmp.ne.s32.totalorder %s75, %s77
      %p81 = scmp.eq.s32.totalorder %s20, 0
      %p82 = por %p80, %p81
      %p83 = scmp.ne.s32.totalorder %s75, %s77
      %p84 = scmp.eq.s32.totalorder %s25, 1
      %p85 = por %p83, %p84
      %p86 = scmp.ne.s32.totalorder %s77, %s78
      %p87 = scmp.eq.s32.totalorder %s25, 0
      %p88 = por %p86, %p87
      %p89 = scmp.ne.s32.totalorder %s77, %s78
      %p90 = scmp.eq.s32.totalorder %s26, 1
      %p91 = por %p89, %p90
      %p93 = scmp.ne.s32.totalorder %s78, %s92
      %p94 = scmp.eq.s32.totalorder %s26, 0
      %p95 = por %p93, %p94
      %s97 = sadd.s32 %s96, 1
      %p100 = scmp.eq.s32.totalorder %s20, 1
      %p101 = scmp.ne.s32.totalorder %s96, %s98
      %p102 = scmp.eq.s32.totalorder %s20, 0
      %p103 = por %p101, %p102
      %p104 = scmp.ne.s32.totalorder %s96, %s98
      %p105 = scmp.eq.s32.totalorder %s25, 1
      %p106 = por %p104, %p105
      %p107 = scmp.ne.s32.totalorder %s98, %s99
      %p108 = scmp.eq.s32.totalorder %s25, 0
      %p109 = por %p107, %p108
      %p110 = scmp.ne.s32.totalorder %s98, %s99
      %p111 = scmp.eq.s32.totalorder %s26, 1
      %p112 = por %p110, %p111
      %p114 = scmp.ne.s32.totalorder %s99, %s113
      %p115 = scmp.eq.s32.totalorder %s26, 0
      %p116 = por %p114, %p115
      %s118 = sadd.s32 %s117, 1
      %p121 = scmp.eq.s32.totalorder %s20, 1
      %p122 = scmp.ne.s32.totalorder %s117, %s119
      %p123 = scmp.eq.s32.totalorder %s20, 0
      %p124 = por %p122, %p123
      %p125 = scmp.ne.s32.totalorder %s117, %s119
      %p126 = scmp.eq.s32.totalorder %s25, 1
      %p127 = por %p125, %p126
      %p128 = scmp.ne.s32.totalorder %s119, %s120
      %p129 = scmp.eq.s32.totalorder %s25, 0
      %p130 = por %p128, %p129
      %p131 = scmp.ne.s32.totalorder %s119, %s120
      %p132 = scmp.eq.s32.totalorder %s26, 1
      %p133 = por %p131, %p132
      %p135 = scmp.ne.s32.totalorder %s120, %s134
      %p136 = scmp.eq.s32.totalorder %s26, 0
      %p137 = por %p135, %p136
      %s139 = sadd.s32 %s138, 1
      %p142 = scmp.eq.s32.totalorder %s20, 1
      %p143 = scmp.ne.s32.totalorder %s138, %s140
      %p144 = scmp.eq.s32.totalorder %s20, 0
      %p145 = por %p143, %p144
      %p146 = scmp.ne.s32.totalorder %s138, %s140
      %p147 = scmp.eq.s32.totalorder %s25, 1
      %p148 = por %p146, %p147
      %p149 = scmp.ne.s32.totalorder %s140, %s141
      %p150 = scmp.eq.s32.totalorder %s25, 0
      %p151 = por %p149, %p150
      %p152 = scmp.ne.s32.totalorder %s140, %s141
      %p153 = scmp.eq.s32.totalorder %s26, 1
      %p154 = por %p152, %p153
      %p156 = scmp.ne.s32.totalorder %s141, %s155
      %p157 = scmp.eq.s32.totalorder %s26, 0
      %p158 = por %p156, %p157
      %s160 = sadd.s32 %s159, 1
      %p163 = scmp.eq.s32.totalorder %s20, 1
      %p164 = scmp.ne.s32.totalorder %s159, %s161
      %p165 = scmp.eq.s32.totalorder %s20, 0
      %p166 = por %p164, %p165
      %p167 = scmp.ne.s32.totalorder %s159, %s161
      %p168 = scmp.eq.s32.totalorder %s25, 1
      %p169 = por %p167, %p168
      %p170 = scmp.ne.s32.totalorder %s161, %s162
      %p171 = scmp.eq.s32.totalorder %s25, 0
      %p172 = por %p170, %p171
      %p173 = scmp.ne.s32.totalorder %s161, %s162
      %p174 = scmp.eq.s32.totalorder %s26, 1
      %p175 = por %p173, %p174
      %p177 = scmp.ne.s32.totalorder %s162, %s176
      %p178 = scmp.eq.s32.totalorder %s26, 0
      %p179 = por %p177, %p178
      %s181 = sadd.s32 %s180, 1
      %p184 = scmp.eq.s32.totalorder %s20, 1
      %p185 = scmp.ne.s32.totalorder %s180, %s182
      %p186 = scmp.eq.s32.totalorder %s20, 0
      %p187 = por %p185, %p186
      %p188 = scmp.ne.s32.totalorder %s180, %s182
      %p189 = scmp.eq.s32.totalorder %s25, 1
      %p190 = por %p188, %p189
      %p191 = scmp.ne.s32.totalorder %s182, %s183
      %p192 = scmp.eq.s32.totalorder %s25, 0
      %p193 = por %p191, %p192
      %p194 = scmp.ne.s32.totalorder %s182, %s183
      %p195 = scmp.eq.s32.totalorder %s26, 1
      %p196 = por %p194, %p195
      %p198 = scmp.ne.s32.totalorder %s183, %s197
      %p199 = scmp.eq.s32.totalorder %s26, 0
      %p200 = por %p198, %p199
      %s202 = sadd.s32 %s201, 1
      %p205 = scmp.eq.s32.totalorder %s20, 1
      %p206 = scmp.ne.s32.totalorder %s201, %s203
      %p207 = scmp.eq.s32.totalorder %s20, 0
      %p208 = por %p206, %p207
      %p209 = scmp.ne.s32.totalorder %s201, %s203
      %p210 = scmp.eq.s32.totalorder %s25, 1
      %p211 = por %p209, %p210
      %p212 = scmp.ne.s32.totalorder %s203, %s204
      %p213 = scmp.eq.s32.totalorder %s25, 0
      %p214 = por %p212, %p213
      %p215 = scmp.ne.s32.totalorder %s203, %s204
      %p216 = scmp.eq.s32.totalorder %s26, 1
      %p217 = por %p215, %p216
      %p219 = scmp.ne.s32.totalorder %s204, %s218
      %p220 = scmp.eq.s32.totalorder %s26, 0
      %p221 = por %p219, %p220
      %s222 = ssub.s32 %s20, %s27
      %p223 = scmp.eq.s32.totalorder %s222, 0
      %s225 = sadd.s32 %s224, 1
      %s226 = scalar_select %p223, %s224, %s225
      %p229 = pneg %p223
      %p230 = scmp.eq.s32.totalorder %s20, 1
      %p231 = por %p229, %p230
      %p232 = scmp.ne.s32.totalorder %s224, %s227
      %p233 = scmp.eq.s32.totalorder %s20, 0
      %p234 = por %p232, %p233
      %p235 = scmp.ne.s32.totalorder %s224, %s227
      %p236 = scmp.eq.s32.totalorder %s25, 1
      %p237 = por %p235, %p236
      %p238 = scmp.ne.s32.totalorder %s227, %s228
      %p239 = scmp.eq.s32.totalorder %s25, 0
      %p240 = por %p238, %p239
      %p241 = scmp.ne.s32.totalorder %s227, %s228
      %p242 = scmp.eq.s32.totalorder %s26, 1
      %p243 = por %p241, %p242
      %p245 = scmp.ne.s32.totalorder %s228, %s244
      %p246 = scmp.eq.s32.totalorder %s26, 0
      %p247 = por %p245, %p246
      %p248 = scmp.le.s32.totalorder 1, %s20
      %p249 = scmp.lt.s32.totalorder %s20, 3
      %p250 = pnand %p248, %p249
      %p251 = pneg %p250
      // Predicated region
      $region9: #{tpu_custom_call.1} parent=5 // pred_check
        _
      $region10: #{tpu_custom_call.1} parent=5 // pred_check_branch
        %253 = sbr.rel (%p250) target = $region12
      $region11: #{tpu_custom_call.1} parent=5 // pred_region
        %s254 = ssub.s32 %s20, 1
        // Predicated region
        $region13: #{tpu_custom_call.1} parent=11 // pred_check
          %p255 = pneg %p67
        $region14: #{tpu_custom_call.1} parent=11 // pred_check_branch
          %257 = sbr.rel (%p255) target = $region16
        $region15: #{tpu_custom_call.1} parent=11 // pred_region
          _
        $region16: #{tpu_custom_call.1} parent=11 // pred_fallthru
          _
        // Predicated region
        $region17: #{tpu_custom_call.1} parent=11 // pred_check
          %p258 = pneg %p88
        $region18: #{tpu_custom_call.1} parent=11 // pred_check_branch
          %260 = sbr.rel (%p258) target = $region20
        $region19: #{tpu_custom_call.1} parent=11 // pred_region
          _
        $region20: #{tpu_custom_call.1} parent=11 // pred_fallthru
          _
        // Predicated region
        $region21: #{tpu_custom_call.1} parent=11 // pred_check
          %p261 = pneg %p109
        $region22: #{tpu_custom_call.1} parent=11 // pred_check_branch
          %263 = sbr.rel (%p261) target = $region24
        $region23: #{tpu_custom_call.1} parent=11 // pred_region
          %s265 = ssub.s32 6144, 6144
          %266 = vsyncadd [#allocation3], %s265
          %s267 = sshll.u32 [#allocation2], 4
          %s268 = int_to_ptr.vmem [resolvable:$true] %s267
          %273 = dma.hbm_to_vmem [thread:$0]  %s3, 6144, %s268, [#allocation3], 128, 128, 8
        $region24: #{tpu_custom_call.1} parent=11 // pred_fallthru
          _
        // Predicated region
        $region25: #{tpu_custom_call.1} parent=11 // pred_check
          %p274 = pneg %p130
        $region26: #{tpu_custom_call.1} parent=11 // pred_check_branch
          %276 = sbr.rel (%p274) target = $region28
        $region27: #{tpu_custom_call.1} parent=11 // pred_region
          _
        $region28: #{tpu_custom_call.1} parent=11 // pred_fallthru
          _
        // Predicated region
        $region29: #{tpu_custom_call.1} parent=11 // pred_check
          %p277 = pneg %p151
        $region30: #{tpu_custom_call.1} parent=11 // pred_check_branch
          %279 = sbr.rel (%p277) target = $region32
        $region31: #{tpu_custom_call.1} parent=11 // pred_region
          %s281 = ssub.s32 2048, 2048
          %282 = vsyncadd [#allocation6], %s281
          %s283 = sshll.u32 [#allocation5], 4
          %s284 = int_to_ptr.vmem [resolvable:$true] %s283
          %289 = dma.hbm_to_vmem [thread:$0]  %s5, 2048, %s284, [#allocation6], 128, 128, 8
        $region32: #{tpu_custom_call.1} parent=11 // pred_fallthru
          _
        // Predicated region
        $region33: #{tpu_custom_call.1} parent=11 // pred_check
          %p290 = pneg %p172
        $region34: #{tpu_custom_call.1} parent=11 // pred_check_branch
          %292 = sbr.rel (%p290) target = $region36
        $region35: #{tpu_custom_call.1} parent=11 // pred_region
          _
        $region36: #{tpu_custom_call.1} parent=11 // pred_fallthru
          _
        // Predicated region
        $region37: #{tpu_custom_call.1} parent=11 // pred_check
          %p293 = pneg %p193
        $region38: #{tpu_custom_call.1} parent=11 // pred_check_branch
          %295 = sbr.rel (%p293) target = $region40
        $region39: #{tpu_custom_call.1} parent=11 // pred_region
          %s297 = ssub.s32 2048, 2048
          %298 = vsyncadd [#allocation6], %s297
          %s299 = sshll.u32 [#allocation7], 4
          %s300 = int_to_ptr.vmem [resolvable:$true] %s299
          %305 = dma.hbm_to_vmem [thread:$0]  %s7, 2048, %s300, [#allocation6], 128, 128, 8
        $region40: #{tpu_custom_call.1} parent=11 // pred_fallthru
          _
        // Predicated region
        $region41: #{tpu_custom_call.1} parent=11 // pred_check
          %p306 = pneg %p214
        $region42: #{tpu_custom_call.1} parent=11 // pred_check_branch
          %308 = sbr.rel (%p306) target = $region44
        $region43: #{tpu_custom_call.1} parent=11 // pred_region
          _
        $region44: #{tpu_custom_call.1} parent=11 // pred_fallthru
          _
      $region12: #{tpu_custom_call.1} parent=5 // pred_fallthru
        _
      %p309 = scmp.lt.s32.totalorder %s20, 2
      // Predicated region
      $region45: #{tpu_custom_call.1} parent=5 // pred_check
        %p310 = pneg %p309
      $region46: #{tpu_custom_call.1} parent=5 // pred_check_branch
        %312 = sbr.rel (%p310) target = $region48
      $region47: #{tpu_custom_call.1} parent=5 // pred_region
        // Predicated region
        $region49: #{tpu_custom_call.1} parent=47 // pred_check
          %p313 = pneg %p40
        $region50: #{tpu_custom_call.1} parent=47 // pred_check_branch
          %315 = sbr.rel (%p313) target = $region52
        $region51: #{tpu_custom_call.1} parent=47 // pred_region
          %p316 = scmp.lt.s32.totalorder %s20, 1
          %s317 = scalar_select %p316, %s20, 1
          %s318 = smul.addr %s317, 3
          %s319 = smul.addr %s318, 8
          %s320 = scalar_lea.vmem %s0, %s319
        $region52: #{tpu_custom_call.1} parent=47 // pred_fallthru
          _
      $region48: #{tpu_custom_call.1} parent=5 // pred_fallthru
        _
      %p321 = scmp.le.s32.totalorder 1, %s20
      %p322 = scmp.lt.s32.totalorder %s20, 3
      %p323 = pnand %p321, %p322
      %p324 = pneg %p323
      // Predicated region
      $region53: #{tpu_custom_call.1} parent=5 // pred_check
        _
      $region54: #{tpu_custom_call.1} parent=5 // pred_check_branch
        %326 = sbr.rel (%p323) target = $region56
      $region55: #{tpu_custom_call.1} parent=5 // pred_region
        %s327 = ssub.s32 %s20, 1
        // Predicated region
        $region57: #{tpu_custom_call.1} parent=55 // pred_check
          %p328 = pneg %p109
        $region58: #{tpu_custom_call.1} parent=55 // pred_check_branch
          %330 = sbr.rel (%p328) target = $region60
        $region59: #{tpu_custom_call.1} parent=55 // pred_region
          %331 = dma.done [#allocation3], 6144
        $region60: #{tpu_custom_call.1} parent=55 // pred_fallthru
          _
        // Predicated region
        $region61: #{tpu_custom_call.1} parent=55 // pred_check
          %p332 = pneg %p151
        $region62: #{tpu_custom_call.1} parent=55 // pred_check_branch
          %334 = sbr.rel (%p332) target = $region64
        $region63: #{tpu_custom_call.1} parent=55 // pred_region
          %335 = dma.done [#allocation6], 2048
        $region64: #{tpu_custom_call.1} parent=55 // pred_fallthru
          _
        // Predicated region
        $region65: #{tpu_custom_call.1} parent=55 // pred_check
          %p336 = pneg %p193
        $region66: #{tpu_custom_call.1} parent=55 // pred_check_branch
          %338 = sbr.rel (%p336) target = $region68
        $region67: #{tpu_custom_call.1} parent=55 // pred_region
          %339 = dma.done [#allocation6], 2048
        $region68: #{tpu_custom_call.1} parent=55 // pred_fallthru
          _
        %p340 = scmp.lt.s32.totalorder %s25, 1
        %s341 = scalar_select %p340, %s25, 1
        %s342 = smul.addr %s341, 3
        %s343 = smul.addr %s342, 8
        %s344 = scalar_lea.vmem %s0, %s343
        %p345 = pneg %p46
        %p346 = pneg %p43
        %p347 = pneg %p67
        %p348 = pneg %p64
        %p349 = pneg %p88
        %p350 = pneg %p85
        %p351 = pneg %p109
        %p352 = pneg %p106
        %p353 = pneg %p130
        %p354 = pneg %p127
        %p355 = pneg %p151
        %p356 = pneg %p148
        %p357 = pneg %p172
        %p358 = pneg %p169
        %p359 = pneg %p193
        %p360 = pneg %p190
        %p361 = pneg %p214
        %p362 = pneg %p211
        %p363 = pneg %p240
        %p364 = pneg %p237
        %s365 = sand.u32 %s227, 1
        %s366 = scalar_lea.sflag [#allocation4], %s365
        %s367 = sand.u32 %s227, 1
        %s368 = smul.addr %s367, 8
        %s369 = scalar_lea.vmem [#allocation8], %s368
        %p370 = scmp.lt.s32.totalorder %s25, 1
        %s371 = scalar_select %p370, %s25, 1
        %s372 = smul.addr %s371, 3
        %s373 = smul.addr %s372, 8
        %s374 = scalar_lea.vmem %s0, %s373
        %v375 = vld [vmem:[%s374] sm:$0xff]
        %v376 = vld [vmem:[%s374 + $0x8] sm:$0xff]
        %v377 = vld [vmem:[%s374 + $0x10] sm:$0xff]
        %v378 = vld [vmem:[%s2] sm:$0x1]
        %vm382 = vcmask 1040384
        %v383 = vrot.slane %v375, 7
        %v384 = vrot.slane %v376, 7
        %v385 = vsel %vm382, %v383, %v384
        %v386 = vrot.slane %v377, 7
        %v387 = vsel %vm382, %v384, %v386
        %v389 = vsel %vm382, 0.0, %v383
        %vm390 = vcmask 1046528
        %v391 = vrot.slane %v375, 1
        %v392 = vrot.slane %v376, 1
        %v393 = vsel %vm390, %v391, %v392
        %v394 = vrot.slane %v377, 1
        %v395 = vsel %vm390, %v392, %v394
        %v397 = vsel %vm390, %v394, 0.0
        %v398 = vld [vmem:[%s1] sm:$0xf]
        %s399 = scalar_lea.vmem %s1, 4
        %v400 = vld [vmem:[%s399] sm:$0xf]
        %vm401 = vcmask 31744
        %v402 = vsel %vm401, %v375, 0
        %v404 = vsel %vm401, %v376, 0
        %v406 = vsel %vm401, %v377, 0
        %vm408 = vcmask 1043456
        %v410 = vsel %vm408, %v400, 0
        %412 = vmatprep.subr.mxu0 0.0
        %413 = vmatpush1.msra.mxu0 0.0
        %414 = vmatprep.subr.mxu0 0.0
        %415 = vmatpush1.msra.mxu0 0.0
        %416 = vmatprep.subr.mxu0 0.0
        %417 = vmatpush1.msra.mxu0 0.0
        %418 = vmatprep.subr.mxu0 0.0
        %419 = vmatpush1.msra.mxu0 0.0
        %420 = vmatprep.subr.mxu0 0.0
        %421 = vmatpush1.msra.mxu0 0.0
        %422 = vmatprep.subr.mxu0 0.0
        %423 = vmatpush1.msra.mxu0 0.0
        %424 = vmatprep.subr.mxu0 0.0
        %425 = vmatpush1.msra.mxu0 0.0
        %426 = vmatprep.subr.mxu0 0.0
        %427 = vmatpush1.msra.mxu0 0.0
        %428 = vmatprep.subr.mxu0 0.0
        %429 = vmatpush1.msra.mxu0 0.0
        %430 = vmatprep.subr.mxu0 0.0
        %431 = vmatpush1.msra.mxu0 0.0
        %432 = vmatprep.subr.mxu0 0.0
        %433 = vmatpush1.msra.mxu0 0.0
        %434 = vmatprep.subr.mxu0 0.0
        %435 = vmatpush1.msra.mxu0 0.0
        %436 = vmatprep.subr.mxu0 0.0
        %437 = vmatpush1.msra.mxu0 0.0
        %438 = vmatprep.subr.mxu0 0.0
        %439 = vmatpush1.msra.mxu0 0.0
        %440 = vmatprep.subr.mxu0 0.0
        %441 = vmatpush1.msra.mxu0 0.0
        %442 = vmatprep.subr.mxu0 0.0
        %443 = vmatpush1.msra.mxu0 %v410
        %444 = vmatprep.subr.mxu0 0.0
        %445 = vmatpush2.msra.mxu0 0.0
        %446 = vmatprep.subr.mxu0 0.0
        %447 = vmatpush2.msra.mxu0 0.0
        %448 = vmatprep.subr.mxu0 0.0
        %449 = vmatpush2.msra.mxu0 0.0
        %450 = vmatprep.subr.mxu0 0.0
        %451 = vmatpush2.msra.mxu0 0.0
        %452 = vmatprep.subr.mxu0 0.0
        %453 = vmatpush2.msra.mxu0 0.0
        %454 = vmatprep.subr.mxu0 0.0
        %455 = vmatpush2.msra.mxu0 0.0
        %456 = vmatprep.subr.mxu0 0.0
        %457 = vmatpush2.msra.mxu0 0.0
        %458 = vmatprep.subr.mxu0 0.0
        %459 = vmatpush2.msra.mxu0 0.0
        %460 = vmatprep.subr.mxu0 0.0
        %461 = vmatpush2.msra.mxu0 0.0
        %462 = vmatprep.subr.mxu0 0.0
        %463 = vmatpush2.msra.mxu0 0.0
        %464 = vmatprep.subr.mxu0 0.0
        %465 = vmatpush2.msra.mxu0 0.0
        %466 = vmatprep.subr.mxu0 0.0
        %467 = vmatpush2.msra.mxu0 0.0
        %468 = vmatprep.subr.mxu0 0.0
        %469 = vmatpush2.msra.mxu0 0.0
        %470 = vmatprep.subr.mxu0 0.0
        %471 = vmatpush2.msra.mxu0 0.0
        %472 = vmatprep.subr.mxu0 0.0
        %473 = vmatpush2.msra.mxu0 0.0
        %474 = vmatprep.subr.mxu0 0.0
        %475 = vmatpush2.msra.mxu0 0.0
        %476 = vmatprep.mubr.f32.mxu0 0.0
        %477 = vmatmul.mubr.f32.gmra.mxu0 %v402
        %v478 = vpop.f32.mrf.mxu0
        %v479 = vadd.f32 0.0, %v478
        %v480 = vpop.f32.mrf.mxu0
        %481 = vmatprep.mubr.f32.mxu0 0.0
        %482 = vmatmul.mubr.f32.gmra.mxu0 %v404
        %v483 = vpop.f32.mrf.mxu0
        %v484 = vadd.f32 0.0, %v483
        %v485 = vpop.f32.mrf.mxu0
        %486 = vmatprep.mubr.f32.mxu0 0.0
        %487 = vmatmul.mubr.f32.gmra.mxu0 %v406
        %v488 = vpop.f32.mrf.mxu0
        %v489 = vadd.f32 0.0, %v488
        %v490 = vpop.f32.mrf.mxu0
        %491 = vdwg.mxu0
        %v493 = vsel %vm401, %v389, 0
        %v495 = vsel %vm401, %v385, 0
        %v497 = vsel %vm401, %v387, 0
        %v500 = vsel %vm408, %v398, 0
        %502 = vmatprep.subr.mxu0 0.0
        %503 = vmatpush1.msra.mxu0 0.0
        %504 = vmatprep.subr.mxu0 0.0
        %505 = vmatpush1.msra.mxu0 0.0
        %506 = vmatprep.subr.mxu0 0.0
        %507 = vmatpush1.msra.mxu0 0.0
        %508 = vmatprep.subr.mxu0 0.0
        %509 = vmatpush1.msra.mxu0 0.0
        %510 = vmatprep.subr.mxu0 0.0
        %511 = vmatpush1.msra.mxu0 0.0
        %512 = vmatprep.subr.mxu0 0.0
        %513 = vmatpush1.msra.mxu0 0.0
        %514 = vmatprep.subr.mxu0 0.0
        %515 = vmatpush1.msra.mxu0 0.0
        %516 = vmatprep.subr.mxu0 0.0
        %517 = vmatpush1.msra.mxu0 0.0
        %518 = vmatprep.subr.mxu0 0.0
        %519 = vmatpush1.msra.mxu0 0.0
        %520 = vmatprep.subr.mxu0 0.0
        %521 = vmatpush1.msra.mxu0 0.0
        %522 = vmatprep.subr.mxu0 0.0
        %523 = vmatpush1.msra.mxu0 0.0
        %524 = vmatprep.subr.mxu0 0.0
        %525 = vmatpush1.msra.mxu0 0.0
        %526 = vmatprep.subr.mxu0 0.0
        %527 = vmatpush1.msra.mxu0 0.0
        %528 = vmatprep.subr.mxu0 0.0
        %529 = vmatpush1.msra.mxu0 0.0
        %530 = vmatprep.subr.mxu0 0.0
        %531 = vmatpush1.msra.mxu0 0.0
        %532 = vmatprep.subr.mxu0 0.0
        %533 = vmatpush1.msra.mxu0 %v500
        %534 = vmatprep.subr.mxu0 0.0
        %535 = vmatpush2.msra.mxu0 0.0
        %536 = vmatprep.subr.mxu0 0.0
        %537 = vmatpush2.msra.mxu0 0.0
        %538 = vmatprep.subr.mxu0 0.0
        %539 = vmatpush2.msra.mxu0 0.0
        %540 = vmatprep.subr.mxu0 0.0
        %541 = vmatpush2.msra.mxu0 0.0
        %542 = vmatprep.subr.mxu0 0.0
        %543 = vmatpush2.msra.mxu0 0.0
        %544 = vmatprep.subr.mxu0 0.0
        %545 = vmatpush2.msra.mxu0 0.0
        %546 = vmatprep.subr.mxu0 0.0
        %547 = vmatpush2.msra.mxu0 0.0
        %548 = vmatprep.subr.mxu0 0.0
        %549 = vmatpush2.msra.mxu0 0.0
        %550 = vmatprep.subr.mxu0 0.0
        %551 = vmatpush2.msra.mxu0 0.0
        %552 = vmatprep.subr.mxu0 0.0
        %553 = vmatpush2.msra.mxu0 0.0
        %554 = vmatprep.subr.mxu0 0.0
        %555 = vmatpush2.msra.mxu0 0.0
        %556 = vmatprep.subr.mxu0 0.0
        %557 = vmatpush2.msra.mxu0 0.0
        %558 = vmatprep.subr.mxu0 0.0
        %559 = vmatpush2.msra.mxu0 0.0
        %560 = vmatprep.subr.mxu0 0.0
        %561 = vmatpush2.msra.mxu0 0.0
        %562 = vmatprep.subr.mxu0 0.0
        %563 = vmatpush2.msra.mxu0 0.0
        %564 = vmatprep.subr.mxu0 0.0
        %565 = vmatpush2.msra.mxu0 0.0
        %566 = vmatprep.mubr.f32.mxu0 0.0
        %567 = vmatmul.mubr.f32.gmra.mxu0 %v493
        %v568 = vpop.f32.mrf.mxu0
        %v569 = vadd.f32 %v479, %v568
        %v570 = vpop.f32.mrf.mxu0
        %571 = vmatprep.mubr.f32.mxu0 0.0
        %572 = vmatmul.mubr.f32.gmra.mxu0 %v495
        %v573 = vpop.f32.mrf.mxu0
        %v574 = vadd.f32 %v484, %v573
        %v575 = vpop.f32.mrf.mxu0
        %576 = vmatprep.mubr.f32.mxu0 0.0
        %577 = vmatmul.mubr.f32.gmra.mxu0 %v497
        %v578 = vpop.f32.mrf.mxu0
        %v579 = vadd.f32 %v489, %v578
        %v580 = vpop.f32.mrf.mxu0
        %581 = vdwg.mxu0
        %s582 = scalar_lea.vmem %s1, 8
        %v583 = vld [vmem:[%s582] sm:$0xf]
        %v584 = vsel %vm401, %v393, 0
        %v586 = vsel %vm401, %v395, 0
        %v589 = vsel %vm401, %v397, 0
        %v592 = vsel %vm408, %v583, 0
        %594 = vmatprep.subr.mxu0 0.0
        %595 = vmatpush1.msra.mxu0 0.0
        %596 = vmatprep.subr.mxu0 0.0
        %597 = vmatpush1.msra.mxu0 0.0
        %598 = vmatprep.subr.mxu0 0.0
        %599 = vmatpush1.msra.mxu0 0.0
        %600 = vmatprep.subr.mxu0 0.0
        %601 = vmatpush1.msra.mxu0 0.0
        %602 = vmatprep.subr.mxu0 0.0
        %603 = vmatpush1.msra.mxu0 0.0
        %604 = vmatprep.subr.mxu0 0.0
        %605 = vmatpush1.msra.mxu0 0.0
        %606 = vmatprep.subr.mxu0 0.0
        %607 = vmatpush1.msra.mxu0 0.0
        %608 = vmatprep.subr.mxu0 0.0
        %609 = vmatpush1.msra.mxu0 0.0
        %610 = vmatprep.subr.mxu0 0.0
        %611 = vmatpush1.msra.mxu0 0.0
        %612 = vmatprep.subr.mxu0 0.0
        %613 = vmatpush1.msra.mxu0 0.0
        %614 = vmatprep.subr.mxu0 0.0
        %615 = vmatpush1.msra.mxu0 0.0
        %616 = vmatprep.subr.mxu0 0.0
        %617 = vmatpush1.msra.mxu0 0.0
        %618 = vmatprep.subr.mxu0 0.0
        %619 = vmatpush1.msra.mxu0 0.0
        %620 = vmatprep.subr.mxu0 0.0
        %621 = vmatpush1.msra.mxu0 0.0
        %622 = vmatprep.subr.mxu0 0.0
        %623 = vmatpush1.msra.mxu0 0.0
        %624 = vmatprep.subr.mxu0 0.0
        %625 = vmatpush1.msra.mxu0 %v592
        %626 = vmatprep.subr.mxu0 0.0
        %627 = vmatpush2.msra.mxu0 0.0
        %628 = vmatprep.subr.mxu0 0.0
        %629 = vmatpush2.msra.mxu0 0.0
        %630 = vmatprep.subr.mxu0 0.0
        %631 = vmatpush2.msra.mxu0 0.0
        %632 = vmatprep.subr.mxu0 0.0
        %633 = vmatpush2.msra.mxu0 0.0
        %634 = vmatprep.subr.mxu0 0.0
        %635 = vmatpush2.msra.mxu0 0.0
        %636 = vmatprep.subr.mxu0 0.0
        %637 = vmatpush2.msra.mxu0 0.0
        %638 = vmatprep.subr.mxu0 0.0
        %639 = vmatpush2.msra.mxu0 0.0
        %640 = vmatprep.subr.mxu0 0.0
        %641 = vmatpush2.msra.mxu0 0.0
        %642 = vmatprep.subr.mxu0 0.0
        %643 = vmatpush2.msra.mxu0 0.0
        %644 = vmatprep.subr.mxu0 0.0
        %645 = vmatpush2.msra.mxu0 0.0
        %646 = vmatprep.subr.mxu0 0.0
        %647 = vmatpush2.msra.mxu0 0.0
        %648 = vmatprep.subr.mxu0 0.0
        %649 = vmatpush2.msra.mxu0 0.0
        %650 = vmatprep.subr.mxu0 0.0
        %651 = vmatpush2.msra.mxu0 0.0
        %652 = vmatprep.subr.mxu0 0.0
        %653 = vmatpush2.msra.mxu0 0.0
        %654 = vmatprep.subr.mxu0 0.0
        %655 = vmatpush2.msra.mxu0 0.0
        %656 = vmatprep.subr.mxu0 0.0
        %657 = vmatpush2.msra.mxu0 0.0
        %658 = vmatprep.mubr.f32.mxu0 0.0
        %659 = vmatmul.mubr.f32.gmra.mxu0 %v584
        %v660 = vpop.f32.mrf.mxu0
        %v661 = vadd.f32 0.0, %v660
        %v662 = vpop.f32.mrf.mxu0
        %663 = vmatprep.mubr.f32.mxu0 0.0
        %664 = vmatmul.mubr.f32.gmra.mxu0 %v586
        %v665 = vpop.f32.mrf.mxu0
        %v666 = vadd.f32 0.0, %v665
        %v667 = vpop.f32.mrf.mxu0
        %668 = vmatprep.mubr.f32.mxu0 0.0
        %669 = vmatmul.mubr.f32.gmra.mxu0 %v589
        %v670 = vpop.f32.mrf.mxu0
        %v671 = vadd.f32 0.0, %v670
        %v672 = vpop.f32.mrf.mxu0
        %673 = vdwg.mxu0
        %v674 = vadd.f32 %v569, %v661
        %v675 = vadd.f32 %v574, %v666
        %v676 = vadd.f32 %v579, %v671
        %v678 = vlaneseq
        %v679 = vshrl.u32 %v678, 7
        %v680 = vsub.s32 0, %v679
        %v681 = vrot.slane %v378, %v680
        %v683 = vadd.f32 %v674, %v681
        %v684 = vadd.f32 %v675, %v681
        %v685 = vadd.f32 %v676, %v681
        %v686 = vmax.f32 %v683, 0.0
        %v687 = vmax.f32 %v684, 0.0
        %v688 = vmax.f32 %v685, 0.0
        %v689 = vld [vmem:[%s4] sm:$0x1]
        %v693 = vrot.slane %v686, 7
        %v694 = vrot.slane %v687, 7
        %v695 = vsel %vm382, %v693, %v694
        %v696 = vrot.slane %v688, 7
        %v697 = vsel %vm382, %v694, %v696
        %v701 = vsel %vm382, 0.0, %v693
        %v702 = vrot.slane %v686, 1
        %v703 = vrot.slane %v687, 1
        %v704 = vsel %vm390, %v702, %v703
        %v705 = vrot.slane %v688, 1
        %v706 = vsel %vm390, %v703, %v705
        %v710 = vsel %vm390, %v705, 0.0
        %v711 = vld [vmem:[#allocation2] sm:$0xff]
        %v712 = vld [vmem:[#allocation2 + $0x8] sm:$0xff]
        %v713 = vld [vmem:[#allocation2 + $0x10] sm:$0xff]
        %v714 = vld [vmem:[#allocation2 + $0x18] sm:$0xff]
        %v715 = vld [vmem:[#allocation2 + $0x20] sm:$0xff]
        %v716 = vld [vmem:[#allocation2 + $0x28] sm:$0xff]
        %v717 = vld [vmem:[#allocation2 + $0x30] sm:$0xff]
        %v718 = vld [vmem:[#allocation2 + $0x38] sm:$0xff]
        %v719 = vld [vmem:[#allocation2 + $0x40] sm:$0xff]
        %v720 = vld [vmem:[#allocation2 + $0x48] sm:$0xff]
        %v721 = vld [vmem:[#allocation2 + $0x50] sm:$0xff]
        %v722 = vld [vmem:[#allocation2 + $0x58] sm:$0xff]
        %v723 = vld [vmem:[#allocation2 + $0x60] sm:$0xff]
        %v724 = vld [vmem:[#allocation2 + $0x68] sm:$0xff]
        %v725 = vld [vmem:[#allocation2 + $0x70] sm:$0xff]
        %v726 = vld [vmem:[#allocation2 + $0x78] sm:$0xff]
        %s727 = scalar_lea.vmem [#allocation2], 128
        %v728 = vld [vmem:[%s727] sm:$0xff]
        %v729 = vld [vmem:[%s727 + $0x8] sm:$0xff]
        %v730 = vld [vmem:[%s727 + $0x10] sm:$0xff]
        %v731 = vld [vmem:[%s727 + $0x18] sm:$0xff]
        %v732 = vld [vmem:[%s727 + $0x20] sm:$0xff]
        %v733 = vld [vmem:[%s727 + $0x28] sm:$0xff]
        %v734 = vld [vmem:[%s727 + $0x30] sm:$0xff]
        %v735 = vld [vmem:[%s727 + $0x38] sm:$0xff]
        %v736 = vld [vmem:[%s727 + $0x40] sm:$0xff]
        %v737 = vld [vmem:[%s727 + $0x48] sm:$0xff]
        %v738 = vld [vmem:[%s727 + $0x50] sm:$0xff]
        %v739 = vld [vmem:[%s727 + $0x58] sm:$0xff]
        %v740 = vld [vmem:[%s727 + $0x60] sm:$0xff]
        %v741 = vld [vmem:[%s727 + $0x68] sm:$0xff]
        %v742 = vld [vmem:[%s727 + $0x70] sm:$0xff]
        %v743 = vld [vmem:[%s727 + $0x78] sm:$0xff]
        %744 = vmatprep.subr.mxu0 0.0
        %745 = vmatpush1.msra.mxu0 %v743
        %746 = vmatprep.subr.mxu0 0.0
        %747 = vmatpush1.msra.mxu0 %v742
        %748 = vmatprep.subr.mxu0 0.0
        %749 = vmatpush1.msra.mxu0 %v741
        %750 = vmatprep.subr.mxu0 0.0
        %751 = vmatpush1.msra.mxu0 %v740
        %752 = vmatprep.subr.mxu0 0.0
        %753 = vmatpush1.msra.mxu0 %v739
        %754 = vmatprep.subr.mxu0 0.0
        %755 = vmatpush1.msra.mxu0 %v738
        %756 = vmatprep.subr.mxu0 0.0
        %757 = vmatpush1.msra.mxu0 %v737
        %758 = vmatprep.subr.mxu0 0.0
        %759 = vmatpush1.msra.mxu0 %v736
        %760 = vmatprep.subr.mxu0 0.0
        %761 = vmatpush1.msra.mxu0 %v735
        %762 = vmatprep.subr.mxu0 0.0
        %763 = vmatpush1.msra.mxu0 %v734
        %764 = vmatprep.subr.mxu0 0.0
        %765 = vmatpush1.msra.mxu0 %v733
        %766 = vmatprep.subr.mxu0 0.0
        %767 = vmatpush1.msra.mxu0 %v732
        %768 = vmatprep.subr.mxu0 0.0
        %769 = vmatpush1.msra.mxu0 %v731
        %770 = vmatprep.subr.mxu0 0.0
        %771 = vmatpush1.msra.mxu0 %v730
        %772 = vmatprep.subr.mxu0 0.0
        %773 = vmatpush1.msra.mxu0 %v729
        %774 = vmatprep.subr.mxu0 0.0
        %775 = vmatpush1.msra.mxu0 %v728
        %776 = vmatprep.subr.mxu0 0.0
        %777 = vmatpush2.msra.mxu0 0.0
        %778 = vmatprep.subr.mxu0 0.0
        %779 = vmatpush2.msra.mxu0 0.0
        %780 = vmatprep.subr.mxu0 0.0
        %781 = vmatpush2.msra.mxu0 0.0
        %782 = vmatprep.subr.mxu0 0.0
        %783 = vmatpush2.msra.mxu0 0.0
        %784 = vmatprep.subr.mxu0 0.0
        %785 = vmatpush2.msra.mxu0 0.0
        %786 = vmatprep.subr.mxu0 0.0
        %787 = vmatpush2.msra.mxu0 0.0
        %788 = vmatprep.subr.mxu0 0.0
        %789 = vmatpush2.msra.mxu0 0.0
        %790 = vmatprep.subr.mxu0 0.0
        %791 = vmatpush2.msra.mxu0 0.0
        %792 = vmatprep.subr.mxu0 0.0
        %793 = vmatpush2.msra.mxu0 0.0
        %794 = vmatprep.subr.mxu0 0.0
        %795 = vmatpush2.msra.mxu0 0.0
        %796 = vmatprep.subr.mxu0 0.0
        %797 = vmatpush2.msra.mxu0 0.0
        %798 = vmatprep.subr.mxu0 0.0
        %799 = vmatpush2.msra.mxu0 0.0
        %800 = vmatprep.subr.mxu0 0.0
        %801 = vmatpush2.msra.mxu0 0.0
        %802 = vmatprep.subr.mxu0 0.0
        %803 = vmatpush2.msra.mxu0 0.0
        %804 = vmatprep.subr.mxu0 0.0
        %805 = vmatpush2.msra.mxu0 0.0
        %806 = vmatprep.subr.mxu0 0.0
        %807 = vmatpush2.msra.mxu0 0.0
        %808 = vmatprep.mubr.f32.mxu0 0.0
        %809 = vmatmul.mubr.f32.gmra.mxu0 %v686
        %v810 = vpop.f32.mrf.mxu0
        %v811 = vadd.f32 0.0, %v810
        %v812 = vpop.f32.mrf.mxu0
        %813 = vmatprep.mubr.f32.mxu0 0.0
        %814 = vmatmul.mubr.f32.gmra.mxu0 %v687
        %v815 = vpop.f32.mrf.mxu0
        %v816 = vadd.f32 0.0, %v815
        %v817 = vpop.f32.mrf.mxu0
        %818 = vmatprep.mubr.f32.mxu0 0.0
        %819 = vmatmul.mubr.f32.gmra.mxu0 %v688
        %v820 = vpop.f32.mrf.mxu0
        %v821 = vadd.f32 0.0, %v820
        %v822 = vpop.f32.mrf.mxu0
        %823 = vdwg.mxu0
        %824 = vmatprep.subr.mxu0 0.0
        %825 = vmatpush1.msra.mxu0 %v726
        %826 = vmatprep.subr.mxu0 0.0
        %827 = vmatpush1.msra.mxu0 %v725
        %828 = vmatprep.subr.mxu0 0.0
        %829 = vmatpush1.msra.mxu0 %v724
        %830 = vmatprep.subr.mxu0 0.0
        %831 = vmatpush1.msra.mxu0 %v723
        %832 = vmatprep.subr.mxu0 0.0
        %833 = vmatpush1.msra.mxu0 %v722
        %834 = vmatprep.subr.mxu0 0.0
        %835 = vmatpush1.msra.mxu0 %v721
        %836 = vmatprep.subr.mxu0 0.0
        %837 = vmatpush1.msra.mxu0 %v720
        %838 = vmatprep.subr.mxu0 0.0
        %839 = vmatpush1.msra.mxu0 %v719
        %840 = vmatprep.subr.mxu0 0.0
        %841 = vmatpush1.msra.mxu0 %v718
        %842 = vmatprep.subr.mxu0 0.0
        %843 = vmatpush1.msra.mxu0 %v717
        %844 = vmatprep.subr.mxu0 0.0
        %845 = vmatpush1.msra.mxu0 %v716
        %846 = vmatprep.subr.mxu0 0.0
        %847 = vmatpush1.msra.mxu0 %v715
        %848 = vmatprep.subr.mxu0 0.0
        %849 = vmatpush1.msra.mxu0 %v714
        %850 = vmatprep.subr.mxu0 0.0
        %851 = vmatpush1.msra.mxu0 %v713
        %852 = vmatprep.subr.mxu0 0.0
        %853 = vmatpush1.msra.mxu0 %v712
        %854 = vmatprep.subr.mxu0 0.0
        %855 = vmatpush1.msra.mxu0 %v711
        %856 = vmatprep.subr.mxu0 0.0
        %857 = vmatpush2.msra.mxu0 0.0
        %858 = vmatprep.subr.mxu0 0.0
        %859 = vmatpush2.msra.mxu0 0.0
        %860 = vmatprep.subr.mxu0 0.0
        %861 = vmatpush2.msra.mxu0 0.0
        %862 = vmatprep.subr.mxu0 0.0
        %863 = vmatpush2.msra.mxu0 0.0
        %864 = vmatprep.subr.mxu0 0.0
        %865 = vmatpush2.msra.mxu0 0.0
        %866 = vmatprep.subr.mxu0 0.0
        %867 = vmatpush2.msra.mxu0 0.0
        %868 = vmatprep.subr.mxu0 0.0
        %869 = vmatpush2.msra.mxu0 0.0
        %870 = vmatprep.subr.mxu0 0.0
        %871 = vmatpush2.msra.mxu0 0.0
        %872 = vmatprep.subr.mxu0 0.0
        %873 = vmatpush2.msra.mxu0 0.0
        %874 = vmatprep.subr.mxu0 0.0
        %875 = vmatpush2.msra.mxu0 0.0
        %876 = vmatprep.subr.mxu0 0.0
        %877 = vmatpush2.msra.mxu0 0.0
        %878 = vmatprep.subr.mxu0 0.0
        %879 = vmatpush2.msra.mxu0 0.0
        %880 = vmatprep.subr.mxu0 0.0
        %881 = vmatpush2.msra.mxu0 0.0
        %882 = vmatprep.subr.mxu0 0.0
        %883 = vmatpush2.msra.mxu0 0.0
        %884 = vmatprep.subr.mxu0 0.0
        %885 = vmatpush2.msra.mxu0 0.0
        %886 = vmatprep.subr.mxu0 0.0
        %887 = vmatpush2.msra.mxu0 0.0
        %888 = vmatprep.mubr.f32.mxu0 0.0
        %889 = vmatmul.mubr.f32.gmra.mxu0 %v701
        %v890 = vpop.f32.mrf.mxu0
        %v891 = vadd.f32 %v811, %v890
        %v892 = vpop.f32.mrf.mxu0
        %893 = vmatprep.mubr.f32.mxu0 0.0
        %894 = vmatmul.mubr.f32.gmra.mxu0 %v695
        %v895 = vpop.f32.mrf.mxu0
        %v896 = vadd.f32 %v816, %v895
        %v897 = vpop.f32.mrf.mxu0
        %898 = vmatprep.mubr.f32.mxu0 0.0
        %899 = vmatmul.mubr.f32.gmra.mxu0 %v697
        %v900 = vpop.f32.mrf.mxu0
        %v901 = vadd.f32 %v821, %v900
        %v902 = vpop.f32.mrf.mxu0
        %903 = vdwg.mxu0
        %s904 = scalar_lea.vmem [#allocation2], 256
        %v905 = vld [vmem:[%s904] sm:$0xff]
        %v906 = vld [vmem:[%s904 + $0x8] sm:$0xff]
        %v907 = vld [vmem:[%s904 + $0x10] sm:$0xff]
        %v908 = vld [vmem:[%s904 + $0x18] sm:$0xff]
        %v909 = vld [vmem:[%s904 + $0x20] sm:$0xff]
        %v910 = vld [vmem:[%s904 + $0x28] sm:$0xff]
        %v911 = vld [vmem:[%s904 + $0x30] sm:$0xff]
        %v912 = vld [vmem:[%s904 + $0x38] sm:$0xff]
        %v913 = vld [vmem:[%s904 + $0x40] sm:$0xff]
        %v914 = vld [vmem:[%s904 + $0x48] sm:$0xff]
        %v915 = vld [vmem:[%s904 + $0x50] sm:$0xff]
        %v916 = vld [vmem:[%s904 + $0x58] sm:$0xff]
        %v917 = vld [vmem:[%s904 + $0x60] sm:$0xff]
        %v918 = vld [vmem:[%s904 + $0x68] sm:$0xff]
        %v919 = vld [vmem:[%s904 + $0x70] sm:$0xff]
        %v920 = vld [vmem:[%s904 + $0x78] sm:$0xff]
        %921 = vmatprep.subr.mxu0 0.0
        %922 = vmatpush1.msra.mxu0 %v920
        %923 = vmatprep.subr.mxu0 0.0
        %924 = vmatpush1.msra.mxu0 %v919
        %925 = vmatprep.subr.mxu0 0.0
        %926 = vmatpush1.msra.mxu0 %v918
        %927 = vmatprep.subr.mxu0 0.0
        %928 = vmatpush1.msra.mxu0 %v917
        %929 = vmatprep.subr.mxu0 0.0
        %930 = vmatpush1.msra.mxu0 %v916
        %931 = vmatprep.subr.mxu0 0.0
        %932 = vmatpush1.msra.mxu0 %v915
        %933 = vmatprep.subr.mxu0 0.0
        %934 = vmatpush1.msra.mxu0 %v914
        %935 = vmatprep.subr.mxu0 0.0
        %936 = vmatpush1.msra.mxu0 %v913
        %937 = vmatprep.subr.mxu0 0.0
        %938 = vmatpush1.msra.mxu0 %v912
        %939 = vmatprep.subr.mxu0 0.0
        %940 = vmatpush1.msra.mxu0 %v911
        %941 = vmatprep.subr.mxu0 0.0
        %942 = vmatpush1.msra.mxu0 %v910
        %943 = vmatprep.subr.mxu0 0.0
        %944 = vmatpush1.msra.mxu0 %v909
        %945 = vmatprep.subr.mxu0 0.0
        %946 = vmatpush1.msra.mxu0 %v908
        %947 = vmatprep.subr.mxu0 0.0
        %948 = vmatpush1.msra.mxu0 %v907
        %949 = vmatprep.subr.mxu0 0.0
        %950 = vmatpush1.msra.mxu0 %v906
        %951 = vmatprep.subr.mxu0 0.0
        %952 = vmatpush1.msra.mxu0 %v905
        %953 = vmatprep.subr.mxu0 0.0
        %954 = vmatpush2.msra.mxu0 0.0
        %955 = vmatprep.subr.mxu0 0.0
        %956 = vmatpush2.msra.mxu0 0.0
        %957 = vmatprep.subr.mxu0 0.0
        %958 = vmatpush2.msra.mxu0 0.0
        %959 = vmatprep.subr.mxu0 0.0
        %960 = vmatpush2.msra.mxu0 0.0
        %961 = vmatprep.subr.mxu0 0.0
        %962 = vmatpush2.msra.mxu0 0.0
        %963 = vmatprep.subr.mxu0 0.0
        %964 = vmatpush2.msra.mxu0 0.0
        %965 = vmatprep.subr.mxu0 0.0
        %966 = vmatpush2.msra.mxu0 0.0
        %967 = vmatprep.subr.mxu0 0.0
        %968 = vmatpush2.msra.mxu0 0.0
        %969 = vmatprep.subr.mxu0 0.0
        %970 = vmatpush2.msra.mxu0 0.0
        %971 = vmatprep.subr.mxu0 0.0
        %972 = vmatpush2.msra.mxu0 0.0
        %973 = vmatprep.subr.mxu0 0.0
        %974 = vmatpush2.msra.mxu0 0.0
        %975 = vmatprep.subr.mxu0 0.0
        %976 = vmatpush2.msra.mxu0 0.0
        %977 = vmatprep.subr.mxu0 0.0
        %978 = vmatpush2.msra.mxu0 0.0
        %979 = vmatprep.subr.mxu0 0.0
        %980 = vmatpush2.msra.mxu0 0.0
        %981 = vmatprep.subr.mxu0 0.0
        %982 = vmatpush2.msra.mxu0 0.0
        %983 = vmatprep.subr.mxu0 0.0
        %984 = vmatpush2.msra.mxu0 0.0
        %985 = vmatprep.mubr.f32.mxu0 0.0
        %986 = vmatmul.mubr.f32.gmra.mxu0 %v704
        %v987 = vpop.f32.mrf.mxu0
        %v988 = vadd.f32 0.0, %v987
        %v989 = vpop.f32.mrf.mxu0
        %990 = vmatprep.mubr.f32.mxu0 0.0
        %991 = vmatmul.mubr.f32.gmra.mxu0 %v706
        %v992 = vpop.f32.mrf.mxu0
        %v993 = vadd.f32 0.0, %v992
        %v994 = vpop.f32.mrf.mxu0
        %995 = vmatprep.mubr.f32.mxu0 0.0
        %996 = vmatmul.mubr.f32.gmra.mxu0 %v710
        %v997 = vpop.f32.mrf.mxu0
        %v998 = vadd.f32 0.0, %v997
        %v999 = vpop.f32.mrf.mxu0
        %1000 = vdwg.mxu0
        %v1001 = vadd.f32 %v891, %v988
        %v1002 = vadd.f32 %v896, %v993
        %v1003 = vadd.f32 %v901, %v998
        %v1005 = vlaneseq
        %v1006 = vshrl.u32 %v1005, 7
        %v1007 = vsub.s32 0, %v1006
        %v1008 = vrot.slane %v689, %v1007
        %v1010 = vadd.f32 %v1001, %v1008
        %v1011 = vadd.f32 %v1002, %v1008
        %v1012 = vadd.f32 %v1003, %v1008
        %v1013 = vadd.f32 %v1010, %v1011
        %v1014 = vadd.f32 %v1013, %v1012
        %v1015 = vrot.slane %v1014, 4
        %v1016 = vadd.f32 %v1014, %v1015
        %v1017 = vrot.slane %v1016, 2
        %v1018 = vadd.f32 %v1016, %v1017
        %v1019 = vrot.slane %v1018, 1
        %v1020 = vadd.f32 %v1018, %v1019
        %v1021 = vrcp.pop 24.0
        %v1022 = vmul.f32 %v1020, %v1021
        %v1023 = vld [vmem:[#allocation5] sm:$0xff]
        %v1024 = vld [vmem:[#allocation5 + $0x8] sm:$0xff]
        %v1025 = vld [vmem:[#allocation5 + $0x10] sm:$0xff]
        %v1026 = vld [vmem:[#allocation5 + $0x18] sm:$0xff]
        %v1027 = vld [vmem:[#allocation5 + $0x20] sm:$0xff]
        %v1028 = vld [vmem:[#allocation5 + $0x28] sm:$0xff]
        %v1029 = vld [vmem:[#allocation5 + $0x30] sm:$0xff]
        %v1030 = vld [vmem:[#allocation5 + $0x38] sm:$0xff]
        %v1031 = vld [vmem:[#allocation5 + $0x40] sm:$0xff]
        %v1032 = vld [vmem:[#allocation5 + $0x48] sm:$0xff]
        %v1033 = vld [vmem:[#allocation5 + $0x50] sm:$0xff]
        %v1034 = vld [vmem:[#allocation5 + $0x58] sm:$0xff]
        %v1035 = vld [vmem:[#allocation5 + $0x60] sm:$0xff]
        %v1036 = vld [vmem:[#allocation5 + $0x68] sm:$0xff]
        %v1037 = vld [vmem:[#allocation5 + $0x70] sm:$0xff]
        %v1038 = vld [vmem:[#allocation5 + $0x78] sm:$0xff]
        %v1039 = vld [vmem:[%s6] sm:$0x1]
        %1040 = vmatprep.subr.mxu0 0.0
        %1041 = vmatpush1.msra.mxu0 %v1038
        %1042 = vmatprep.subr.mxu0 0.0
        %1043 = vmatpush1.msra.mxu0 %v1037
        %1044 = vmatprep.subr.mxu0 0.0
        %1045 = vmatpush1.msra.mxu0 %v1036
        %1046 = vmatprep.subr.mxu0 0.0
        %1047 = vmatpush1.msra.mxu0 %v1035
        %1048 = vmatprep.subr.mxu0 0.0
        %1049 = vmatpush1.msra.mxu0 %v1034
        %1050 = vmatprep.subr.mxu0 0.0
        %1051 = vmatpush1.msra.mxu0 %v1033
        %1052 = vmatprep.subr.mxu0 0.0
        %1053 = vmatpush1.msra.mxu0 %v1032
        %1054 = vmatprep.subr.mxu0 0.0
        %1055 = vmatpush1.msra.mxu0 %v1031
        %1056 = vmatprep.subr.mxu0 0.0
        %1057 = vmatpush1.msra.mxu0 %v1030
        %1058 = vmatprep.subr.mxu0 0.0
        %1059 = vmatpush1.msra.mxu0 %v1029
        %1060 = vmatprep.subr.mxu0 0.0
        %1061 = vmatpush1.msra.mxu0 %v1028
        %1062 = vmatprep.subr.mxu0 0.0
        %1063 = vmatpush1.msra.mxu0 %v1027
        %1064 = vmatprep.subr.mxu0 0.0
        %1065 = vmatpush1.msra.mxu0 %v1026
        %1066 = vmatprep.subr.mxu0 0.0
        %1067 = vmatpush1.msra.mxu0 %v1025
        %1068 = vmatprep.subr.mxu0 0.0
        %1069 = vmatpush1.msra.mxu0 %v1024
        %1070 = vmatprep.subr.mxu0 0.0
        %1071 = vmatpush1.msra.mxu0 %v1023
        %1072 = vmatprep.subr.mxu0 0.0
        %1073 = vmatpush2.msra.mxu0 0.0
        %1074 = vmatprep.subr.mxu0 0.0
        %1075 = vmatpush2.msra.mxu0 0.0
        %1076 = vmatprep.subr.mxu0 0.0
        %1077 = vmatpush2.msra.mxu0 0.0
        %1078 = vmatprep.subr.mxu0 0.0
        %1079 = vmatpush2.msra.mxu0 0.0
        %1080 = vmatprep.subr.mxu0 0.0
        %1081 = vmatpush2.msra.mxu0 0.0
        %1082 = vmatprep.subr.mxu0 0.0
        %1083 = vmatpush2.msra.mxu0 0.0
        %1084 = vmatprep.subr.mxu0 0.0
        %1085 = vmatpush2.msra.mxu0 0.0
        %1086 = vmatprep.subr.mxu0 0.0
        %1087 = vmatpush2.msra.mxu0 0.0
        %1088 = vmatprep.subr.mxu0 0.0
        %1089 = vmatpush2.msra.mxu0 0.0
        %1090 = vmatprep.subr.mxu0 0.0
        %1091 = vmatpush2.msra.mxu0 0.0
        %1092 = vmatprep.subr.mxu0 0.0
        %1093 = vmatpush2.msra.mxu0 0.0
        %1094 = vmatprep.subr.mxu0 0.0
        %1095 = vmatpush2.msra.mxu0 0.0
        %1096 = vmatprep.subr.mxu0 0.0
        %1097 = vmatpush2.msra.mxu0 0.0
        %1098 = vmatprep.subr.mxu0 0.0
        %1099 = vmatpush2.msra.mxu0 0.0
        %1100 = vmatprep.subr.mxu0 0.0
        %1101 = vmatpush2.msra.mxu0 0.0
        %1102 = vmatprep.subr.mxu0 0.0
        %1103 = vmatpush2.msra.mxu0 0.0
        %1104 = vmatprep.mubr.f32.mxu0 0.0
        %1105 = vmatmul.mubr.f32.gmra.mxu0 %v1022
        %v1106 = vpop.f32.mrf.mxu0
        %v1107 = vadd.f32 %v1039, %v1106
        %v1108 = vpop.f32.mrf.mxu0
        %1109 = vdwg.mxu0
        %v1110 = vmax.f32 %v1107, 0.0
        %v1111 = vld [vmem:[#allocation7] sm:$0xff]
        %v1112 = vld [vmem:[#allocation7 + $0x8] sm:$0xff]
        %v1113 = vld [vmem:[#allocation7 + $0x10] sm:$0xff]
        %v1114 = vld [vmem:[#allocation7 + $0x18] sm:$0xff]
        %v1115 = vld [vmem:[#allocation7 + $0x20] sm:$0xff]
        %v1116 = vld [vmem:[#allocation7 + $0x28] sm:$0xff]
        %v1117 = vld [vmem:[#allocation7 + $0x30] sm:$0xff]
        %v1118 = vld [vmem:[#allocation7 + $0x38] sm:$0xff]
        %v1119 = vld [vmem:[#allocation7 + $0x40] sm:$0xff]
        %v1120 = vld [vmem:[#allocation7 + $0x48] sm:$0xff]
        %v1121 = vld [vmem:[#allocation7 + $0x50] sm:$0xff]
        %v1122 = vld [vmem:[#allocation7 + $0x58] sm:$0xff]
        %v1123 = vld [vmem:[#allocation7 + $0x60] sm:$0xff]
        %v1124 = vld [vmem:[#allocation7 + $0x68] sm:$0xff]
        %v1125 = vld [vmem:[#allocation7 + $0x70] sm:$0xff]
        %v1126 = vld [vmem:[#allocation7 + $0x78] sm:$0xff]
        %v1127 = vld [vmem:[%s8] sm:$0x1]
        %1128 = vmatprep.subr.mxu0 0.0
        %1129 = vmatpush1.msra.mxu0 %v1126
        %1130 = vmatprep.subr.mxu0 0.0
        %1131 = vmatpush1.msra.mxu0 %v1125
        %1132 = vmatprep.subr.mxu0 0.0
        %1133 = vmatpush1.msra.mxu0 %v1124
        %1134 = vmatprep.subr.mxu0 0.0
        %1135 = vmatpush1.msra.mxu0 %v1123
        %1136 = vmatprep.subr.mxu0 0.0
        %1137 = vmatpush1.msra.mxu0 %v1122
        %1138 = vmatprep.subr.mxu0 0.0
        %1139 = vmatpush1.msra.mxu0 %v1121
        %1140 = vmatprep.subr.mxu0 0.0
        %1141 = vmatpush1.msra.mxu0 %v1120
        %1142 = vmatprep.subr.mxu0 0.0
        %1143 = vmatpush1.msra.mxu0 %v1119
        %1144 = vmatprep.subr.mxu0 0.0
        %1145 = vmatpush1.msra.mxu0 %v1118
        %1146 = vmatprep.subr.mxu0 0.0
        %1147 = vmatpush1.msra.mxu0 %v1117
        %1148 = vmatprep.subr.mxu0 0.0
        %1149 = vmatpush1.msra.mxu0 %v1116
        %1150 = vmatprep.subr.mxu0 0.0
        %1151 = vmatpush1.msra.mxu0 %v1115
        %1152 = vmatprep.subr.mxu0 0.0
        %1153 = vmatpush1.msra.mxu0 %v1114
        %1154 = vmatprep.subr.mxu0 0.0
        %1155 = vmatpush1.msra.mxu0 %v1113
        %1156 = vmatprep.subr.mxu0 0.0
        %1157 = vmatpush1.msra.mxu0 %v1112
        %1158 = vmatprep.subr.mxu0 0.0
        %1159 = vmatpush1.msra.mxu0 %v1111
        %1160 = vmatprep.subr.mxu0 0.0
        %1161 = vmatpush2.msra.mxu0 0.0
        %1162 = vmatprep.subr.mxu0 0.0
        %1163 = vmatpush2.msra.mxu0 0.0
        %1164 = vmatprep.subr.mxu0 0.0
        %1165 = vmatpush2.msra.mxu0 0.0
        %1166 = vmatprep.subr.mxu0 0.0
        %1167 = vmatpush2.msra.mxu0 0.0
        %1168 = vmatprep.subr.mxu0 0.0
        %1169 = vmatpush2.msra.mxu0 0.0
        %1170 = vmatprep.subr.mxu0 0.0
        %1171 = vmatpush2.msra.mxu0 0.0
        %1172 = vmatprep.subr.mxu0 0.0
        %1173 = vmatpush2.msra.mxu0 0.0
        %1174 = vmatprep.subr.mxu0 0.0
        %1175 = vmatpush2.msra.mxu0 0.0
        %1176 = vmatprep.subr.mxu0 0.0
        %1177 = vmatpush2.msra.mxu0 0.0
        %1178 = vmatprep.subr.mxu0 0.0
        %1179 = vmatpush2.msra.mxu0 0.0
        %1180 = vmatprep.subr.mxu0 0.0
        %1181 = vmatpush2.msra.mxu0 0.0
        %1182 = vmatprep.subr.mxu0 0.0
        %1183 = vmatpush2.msra.mxu0 0.0
        %1184 = vmatprep.subr.mxu0 0.0
        %1185 = vmatpush2.msra.mxu0 0.0
        %1186 = vmatprep.subr.mxu0 0.0
        %1187 = vmatpush2.msra.mxu0 0.0
        %1188 = vmatprep.subr.mxu0 0.0
        %1189 = vmatpush2.msra.mxu0 0.0
        %1190 = vmatprep.subr.mxu0 0.0
        %1191 = vmatpush2.msra.mxu0 0.0
        %1192 = vmatprep.mubr.f32.mxu0 0.0
        %1193 = vmatmul.mubr.f32.gmra.mxu0 %v1110
        %v1194 = vpop.f32.mrf.mxu0
        %v1195 = vadd.f32 %v1127, %v1194
        %v1196 = vpop.f32.mrf.mxu0
        %1197 = vdwg.mxu0
        %v1198 = vsub.f32 0.0, %v1195
        %v1199 = vmul.f32 %v1198, 1.442695
        %v1200 = vpow.pop %v1199
        %v1201 = vadd.f32 %v1200, 1.0
        %v1202 = vrcp.pop %v1201
        %v1203 = vmul.f32 1.0, %v1202
        %v1204 = vadd.f32 %v1203, 1.0
        %v1205 = vlaneseq
        %v1206 = vshrl.u32 %v1205, 7
        %v1207 = vsub.s32 0, %v1206
        %v1208 = vrot.slane %v1204, %v1207
        %v1209 = vmul.f32 %v1010, %v1208
        %v1210 = vmul.f32 %v1011, %v1208
        %v1211 = vmul.f32 %v1012, %v1208
        %v1212 = vmax.f32 %v1209, 0.0
        %v1213 = vmax.f32 %v1210, 0.0
        %v1214 = vmax.f32 %v1211, 0.0
        %v1218 = vcombine.high %v1212, %v1212
        %v1220 = vunpack.c.l.s4 1966171168
        %v1221 = vunpack.c.0.s8 %v1220
        %v1222 = vlaneseq
        %v1223 = vshrl.u32 %v1222, 7
        %v1224 = vsub.s32 %v1221, %v1223
        %v1225 = vrot.slane %v1212, %v1224
        %v1227 = vunpack.c.l.s4 1966171168
        %v1228 = vunpack.c.0.s8 %v1227
        %v1229 = vlaneseq
        %v1230 = vshrl.u32 %v1229, 7
        %v1231 = vsub.s32 %v1228, %v1230
        %v1232 = vrot.slane %v1218, %v1231
        %v1233 = vcombine.high %v1225, %v1225
        %v1234 = vcombine.high %v1232, %v1232
        %v1236 = vunpack.c.l.s4 1966171168
        %v1237 = vunpack.c.0.s8 %v1236
        %v1238 = vlaneseq
        %v1239 = vshrl.u32 %v1238, 7
        %v1240 = vsub.s32 %v1237, %v1239
        %v1241 = vrot.slane %v1225, %v1240
        %v1243 = vunpack.c.l.s4 1966171168
        %v1244 = vunpack.c.0.s8 %v1243
        %v1245 = vlaneseq
        %v1246 = vshrl.u32 %v1245, 7
        %v1247 = vsub.s32 %v1244, %v1246
        %v1248 = vrot.slane %v1232, %v1247
        %v1250 = vunpack.c.l.s4 1966171168
        %v1251 = vunpack.c.0.s8 %v1250
        %v1252 = vlaneseq
        %v1253 = vshrl.u32 %v1252, 7
        %v1254 = vsub.s32 %v1251, %v1253
        %v1255 = vrot.slane %v1233, %v1254
        %v1257 = vunpack.c.l.s4 1966171168
        %v1258 = vunpack.c.0.s8 %v1257
        %v1259 = vlaneseq
        %v1260 = vshrl.u32 %v1259, 7
        %v1261 = vsub.s32 %v1258, %v1260
        %v1262 = vrot.slane %v1234, %v1261
        %v1263 = vcombine.high %v1241, %v1241
        %v1264 = vcombine.high %v1248, %v1248
        %v1265 = vcombine.high %v1255, %v1255
        %v1266 = vcombine.high %v1262, %v1262
        %v1267 = vcombine.high %v1213, %v1213
        %v1269 = vunpack.c.l.s4 1966171168
        %v1270 = vunpack.c.0.s8 %v1269
        %v1271 = vlaneseq
        %v1272 = vshrl.u32 %v1271, 7
        %v1273 = vsub.s32 %v1270, %v1272
        %v1274 = vrot.slane %v1213, %v1273
        %v1276 = vunpack.c.l.s4 1966171168
        %v1277 = vunpack.c.0.s8 %v1276
        %v1278 = vlaneseq
        %v1279 = vshrl.u32 %v1278, 7
        %v1280 = vsub.s32 %v1277, %v1279
        %v1281 = vrot.slane %v1267, %v1280
        %v1282 = vcombine.high %v1274, %v1274
        %v1283 = vcombine.high %v1281, %v1281
        %v1285 = vunpack.c.l.s4 1966171168
        %v1286 = vunpack.c.0.s8 %v1285
        %v1287 = vlaneseq
        %v1288 = vshrl.u32 %v1287, 7
        %v1289 = vsub.s32 %v1286, %v1288
        %v1290 = vrot.slane %v1274, %v1289
        %v1292 = vunpack.c.l.s4 1966171168
        %v1293 = vunpack.c.0.s8 %v1292
        %v1294 = vlaneseq
        %v1295 = vshrl.u32 %v1294, 7
        %v1296 = vsub.s32 %v1293, %v1295
        %v1297 = vrot.slane %v1281, %v1296
        %v1299 = vunpack.c.l.s4 1966171168
        %v1300 = vunpack.c.0.s8 %v1299
        %v1301 = vlaneseq
        %v1302 = vshrl.u32 %v1301, 7
        %v1303 = vsub.s32 %v1300, %v1302
        %v1304 = vrot.slane %v1282, %v1303
        %v1306 = vunpack.c.l.s4 1966171168
        %v1307 = vunpack.c.0.s8 %v1306
        %v1308 = vlaneseq
        %v1309 = vshrl.u32 %v1308, 7
        %v1310 = vsub.s32 %v1307, %v1309
        %v1311 = vrot.slane %v1283, %v1310
        %v1312 = vcombine.high %v1290, %v1290
        %v1313 = vcombine.high %v1297, %v1297
        %v1314 = vcombine.high %v1304, %v1304
        %v1315 = vcombine.high %v1311, %v1311
        %v1316 = vcombine.high %v1214, %v1214
        %v1318 = vunpack.c.l.s4 1966171168
        %v1319 = vunpack.c.0.s8 %v1318
        %v1320 = vlaneseq
        %v1321 = vshrl.u32 %v1320, 7
        %v1322 = vsub.s32 %v1319, %v1321
        %v1323 = vrot.slane %v1214, %v1322
        %v1325 = vunpack.c.l.s4 1966171168
        %v1326 = vunpack.c.0.s8 %v1325
        %v1327 = vlaneseq
        %v1328 = vshrl.u32 %v1327, 7
        %v1329 = vsub.s32 %v1326, %v1328
        %v1330 = vrot.slane %v1316, %v1329
        %v1331 = vcombine.high %v1323, %v1323
        %v1332 = vcombine.high %v1330, %v1330
        %v1334 = vunpack.c.l.s4 1966171168
        %v1335 = vunpack.c.0.s8 %v1334
        %v1336 = vlaneseq
        %v1337 = vshrl.u32 %v1336, 7
        %v1338 = vsub.s32 %v1335, %v1337
        %v1339 = vrot.slane %v1323, %v1338
        %v1341 = vunpack.c.l.s4 1966171168
        %v1342 = vunpack.c.0.s8 %v1341
        %v1343 = vlaneseq
        %v1344 = vshrl.u32 %v1343, 7
        %v1345 = vsub.s32 %v1342, %v1344
        %v1346 = vrot.slane %v1330, %v1345
        %v1348 = vunpack.c.l.s4 1966171168
        %v1349 = vunpack.c.0.s8 %v1348
        %v1350 = vlaneseq
        %v1351 = vshrl.u32 %v1350, 7
        %v1352 = vsub.s32 %v1349, %v1351
        %v1353 = vrot.slane %v1331, %v1352
        %v1355 = vunpack.c.l.s4 1966171168
        %v1356 = vunpack.c.0.s8 %v1355
        %v1357 = vlaneseq
        %v1358 = vshrl.u32 %v1357, 7
        %v1359 = vsub.s32 %v1356, %v1358
        %v1360 = vrot.slane %v1332, %v1359
        %v1361 = vcombine.high %v1339, %v1339
        %v1362 = vcombine.high %v1346, %v1346
        %v1363 = vcombine.high %v1353, %v1353
        %v1364 = vcombine.high %v1360, %v1360
        %v1389 = vmax.f32 %v1241, %v1255
        %v1390 = vmax.f32 %v1265, %v1248
        %v1391 = vmax.f32 %v1264, %v1266
        %v1392 = vmax.f32 %v1304, %v1312
        %v1393 = vmax.f32 %v1297, %v1311
        %v1394 = vmax.f32 %v1315, %v1339
        %v1395 = vmax.f32 %v1361, %v1363
        %v1396 = vmax.f32 %v1360, %v1362
        %v1397 = vmax.f32 %v1389, %v1263
        %v1398 = vmax.f32 %v1390, %v1262
        %v1399 = vmax.f32 %v1391, %v1290
        %v1400 = vmax.f32 %v1392, %v1314
        %v1401 = vmax.f32 %v1393, %v1313
        %v1402 = vmax.f32 %v1394, %v1353
        %v1403 = vmax.f32 %v1395, %v1346
        %v1404 = vmax.f32 %v1396, %v1364
        %v1413 = vcombine.low %v1397, %v1398
        %v1414 = vcombine.low %v1399, %v1400
        %v1415 = vcombine.low %v1401, %v1402
        %v1416 = vcombine.low %v1403, %v1404
        %v1418 = vunpack.c.l.s4 1966171168
        %v1419 = vunpack.c.0.s8 %v1418
        %v1420 = vlaneseq
        %v1421 = vshrl.u32 %v1420, 7
        %v1422 = vsub.s32 %v1419, %v1421
        %v1423 = vrot.slane %v1413, %v1422
        %v1425 = vunpack.c.l.s4 1966171168
        %v1426 = vunpack.c.0.s8 %v1425
        %v1427 = vlaneseq
        %v1428 = vshrl.u32 %v1427, 7
        %v1429 = vsub.s32 %v1426, %v1428
        %v1430 = vrot.slane %v1414, %v1429
        %v1432 = vunpack.c.l.s4 1966171168
        %v1433 = vunpack.c.0.s8 %v1432
        %v1434 = vlaneseq
        %v1435 = vshrl.u32 %v1434, 7
        %v1436 = vsub.s32 %v1433, %v1435
        %v1437 = vrot.slane %v1415, %v1436
        %v1439 = vunpack.c.l.s4 1966171168
        %v1440 = vunpack.c.0.s8 %v1439
        %v1441 = vlaneseq
        %v1442 = vshrl.u32 %v1441, 7
        %v1443 = vsub.s32 %v1440, %v1442
        %v1444 = vrot.slane %v1416, %v1443
        %v1445 = vcombine.low %v1423, %v1430
        %v1446 = vcombine.low %v1437, %v1444
        %v1448 = vunpack.c.l.s4 1966171168
        %v1449 = vunpack.c.0.s8 %v1448
        %v1450 = vlaneseq
        %v1451 = vshrl.u32 %v1450, 7
        %v1452 = vsub.s32 %v1449, %v1451
        %v1453 = vrot.slane %v1445, %v1452
        %v1455 = vunpack.c.l.s4 1966171168
        %v1456 = vunpack.c.0.s8 %v1455
        %v1457 = vlaneseq
        %v1458 = vshrl.u32 %v1457, 7
        %v1459 = vsub.s32 %v1456, %v1458
        %v1460 = vrot.slane %v1446, %v1459
        %v1461 = vcombine.low %v1453, %v1460
        %vm1463 = vcmask 64512
        %1464 = vst.msk [vmem:[%s369] sm:$0xff] %vm1463, %v1461
        %s1465 = sand.u32 %s227, 1
        %s1466 = scalar_lea.sflag [#allocation4], %s1465
        %s1467 = sand.u32 %s227, 1
        %s1468 = smul.addr %s1467, 8
        %s1469 = scalar_lea.vmem [#allocation8], %s1468
        // Predicated region
        $region69: #{tpu_custom_call.1} parent=55 // pred_check
          %p1470 = pneg %p237
        $region70: #{tpu_custom_call.1} parent=55 // pred_check_branch
          %1472 = sbr.rel (%p1470) target = $region72
        $region71: #{tpu_custom_call.1} parent=55 // pred_region
          %s1474 = ssub.s32 128, 128
          %1475 = vsyncadd %s1466, %s1474
          %s1476 = smul.addr %s25, 128
          %s1477 = scalar_lea.hbm %s9, %s1476
          %s1479 = sshll.u32 %s1469, 4
          %s1480 = int_to_ptr.vmem [resolvable:$true] %s1479
          %1482 = dma.vmem_to_hbm [thread:$0]  %s1480, 128, %s1477, %s1466
        $region72: #{tpu_custom_call.1} parent=55 // pred_fallthru
          _
      $region56: #{tpu_custom_call.1} parent=5 // pred_fallthru
        _
      %p1483 = scmp.le.s32.totalorder 2, %s20
      // Predicated region
      $region73: #{tpu_custom_call.1} parent=5 // pred_check
        %p1484 = pneg %p1483
      $region74: #{tpu_custom_call.1} parent=5 // pred_check_branch
        %1486 = sbr.rel (%p1484) target = $region76
      $region75: #{tpu_custom_call.1} parent=5 // pred_region
        %s1487 = ssub.s32 %s20, 2
        // Predicated region
        $region77: #{tpu_custom_call.1} parent=75 // pred_check
          %p1488 = pneg %p243
        $region78: #{tpu_custom_call.1} parent=75 // pred_check_branch
          %1490 = sbr.rel (%p1488) target = $region80
        $region79: #{tpu_custom_call.1} parent=75 // pred_region
          %s1491 = sand.u32 %s228, 1
          %s1492 = scalar_lea.sflag [#allocation4], %s1491
          %s1493 = sand.u32 %s228, 1
          %s1494 = smul.addr %s1493, 8
          %s1495 = scalar_lea.vmem [#allocation8], %s1494
          %1496 = dma.done %s1492, 128
        $region80: #{tpu_custom_call.1} parent=75 // pred_fallthru
          _
      $region76: #{tpu_custom_call.1} parent=5 // pred_fallthru
        _
    $region6: #{tpu_custom_call.1} parent=1 // loop_footer
      %s24 = sadd.s32 1, %s20
    $region7: #{tpu_custom_call.1} parent=1 // loop_footer_branch
      %19 = sbr.rel target = $region3
    $region8: #{tpu_custom_call.1} parent=1 // loop_exit
      _
    %1497 = vsyncpa [#allocation3], 1
    %s1498 = scalar_lea.sflag [#allocation3], 1
    %1499 = vsyncpa %s1498, 1
    %1500 = vsyncpa [#allocation6], 1
    %1501 = vsyncpa [#allocation4], 1
    %s1502 = scalar_lea.sflag [#allocation4], 1
    %1503 = vsyncpa %s1502, 1

</llo_original>
